<compile_context>
chip_gen: v6e
topology: v6e:2x2x1
jax: 0.10.0
libtpu: 0.0.40
codegen_flags: <defaults>
</compile_context>

<pallas_src>
import functools

import jax
import jax.numpy as jnp
from jax.experimental import pallas as pl
from jax.experimental.pallas import tpu as pltpu


def _round_up(n, m):
    return ((n + m - 1) // m) * m


def _cdiv(a, b):
    return -(-a // b)


def _vmem_budget_bytes():
    """~75% of physical per-core VMEM; falls back to v7x's 64 MiB if unknown."""
    cap = 64 * 1024 * 1024
    try:
        info = pltpu.get_tpu_info()
        cap = int(getattr(info, "vmem_capacity_bytes", cap))
    except Exception:
        pass
    return int(0.75 * cap)


# --------------------------------------------------------------------------
# Kernels
# --------------------------------------------------------------------------
def _resident_kernel(x_ref, w_in_ref, b_in_ref, w1_ref, b1_ref,
                     w2_ref, b2_ref, w_out_ref, b_out_ref, y_ref, *, n_blocks):
    """Grid = (batch_tiles,).  All weights resident in VMEM.

    x_ref:   (TB, in_p)            bf16
    w_in:    (in_p, h_p)           bf16    b_in: (1, h_p)  f32
    w1/w2:   (n_blocks, h_p, h_p)  bf16    b1/b2: (n_blocks, 1, h_p) f32
    w_out:   (h_p, out_p)          bf16    b_out: (1, out_p) f32
    y_ref:   (TB, out_p)           f32
    """
    bf16 = jnp.bfloat16
    h = jnp.dot(x_ref[...], w_in_ref[...],
                preferred_element_type=jnp.float32) + b_in_ref[...]

    # Static Python loop -> fully unrolled, static (free) slices into the
    # resident weight stack.  n_blocks is small for this module.
    for blk in range(n_blocks):
        t = jnp.dot(h.astype(bf16), w1_ref[blk],
                    preferred_element_type=jnp.float32) + b1_ref[blk]
        t = jnp.maximum(t, 0.0)
        t = jnp.dot(t.astype(bf16), w2_ref[blk],
                    preferred_element_type=jnp.float32) + b2_ref[blk]
        t = jnp.maximum(t, 0.0)
        h = h + t                                   # residual add (f32)

    y = jnp.dot(h.astype(bf16), w_out_ref[...],
                preferred_element_type=jnp.float32) + b_out_ref[...]
    y_ref[...] = y.astype(y_ref.dtype)


def _streaming_kernel(x_ref, w_in_ref, b_in_ref, w1_ref, b1_ref,
                      w2_ref, b2_ref, w_out_ref, b_out_ref, y_ref, h_acc):
    """Grid = (batch_tiles, n_blocks).  Block weights pipelined from HBM,
    activation carried across the block axis in a VMEM f32 scratch."""
    blk = pl.program_id(1)

    @pl.when(blk == 0)
    def _():
        h_acc[...] = jnp.dot(x_ref[...], w_in_ref[...],
                             preferred_element_type=jnp.float32) + b_in_ref[...]

    h = h_acc[...]
    t = jnp.dot(h.astype(jnp.bfloat16), w1_ref[0],
                preferred_element_type=jnp.float32) + b1_ref[0]
    t = jnp.maximum(t, 0.0)
    t = jnp.dot(t.astype(jnp.bfloat16), w2_ref[0],
                preferred_element_type=jnp.float32) + b2_ref[0]
    t = jnp.maximum(t, 0.0)
    h = h + t
    h_acc[...] = h

    @pl.when(blk == pl.num_programs(1) - 1)
    def _():
        y = jnp.dot(h.astype(jnp.bfloat16), w_out_ref[...],
                    preferred_element_type=jnp.float32) + b_out_ref[...]
        y_ref[...] = y.astype(y_ref.dtype)


# --------------------------------------------------------------------------
# Host-side wrapper
# --------------------------------------------------------------------------
def prepare_params(params, n_blocks):
    """One-time weight padding + bf16 cast (hoisted out of the forward path).

    Zero padding is exact: padded feature columns stay 0 through every
    linear + bias(0) + relu + residual and contribute nothing to y.
    """
    in_dim, h_dim = params["w_in"].shape
    out_dim = params["w_out"].shape[1]
    in_p, h_p, out_p = (_round_up(in_dim, 128), _round_up(h_dim, 128),
                        _round_up(out_dim, 128))
    f32, bf16 = jnp.float32, jnp.bfloat16
    pp = {
        "w_in":  jnp.pad(params["w_in"], ((0, in_p - in_dim), (0, h_p - h_dim))).astype(bf16),
        "b_in":  jnp.pad(params["b_in"], ((0, 0), (0, h_p - h_dim))).astype(f32),
        "w1":    jnp.pad(params["w1"], ((0, 0), (0, h_p - h_dim), (0, h_p - h_dim))).astype(bf16),
        "b1":    jnp.pad(params["b1"], ((0, 0), (0, 0), (0, h_p - h_dim))).astype(f32),
        "w2":    jnp.pad(params["w2"], ((0, 0), (0, h_p - h_dim), (0, h_p - h_dim))).astype(bf16),
        "b2":    jnp.pad(params["b2"], ((0, 0), (0, 0), (0, h_p - h_dim))).astype(f32),
        "w_out": jnp.pad(params["w_out"], ((0, h_p - h_dim), (0, out_p - out_dim))).astype(bf16),
        "b_out": jnp.pad(params["b_out"], ((0, 0), (0, out_p - out_dim))).astype(f32),
    }
    pp = jax.tree_util.tree_map(lambda a: jax.block_until_ready(a), pp)
    meta = dict(in_dim=in_dim, h_dim=h_dim, out_dim=out_dim,
                in_p=in_p, h_p=h_p, out_p=out_p, n_blocks=n_blocks)
    return pp, meta


def _choose_batch_tiling(batch, tb_cap):
    """Balanced batch tiles within tb_cap; >=2 tiles for large batches (megacore)."""
    tb_cap = max(8, (tb_cap // 8) * 8)
    n_bt = max(1, _cdiv(batch, tb_cap))
    if n_bt == 1 and batch >= 256:        # give v7x's second TensorCore work
        n_bt = 2
    tb = _round_up(_cdiv(batch, n_bt), 8)
    # Prefer a 128-aligned M tile when it costs little extra padding.
    tb_al = _round_up(tb, 128)
    if n_bt * tb_al <= _round_up(batch + max(8, batch // 8), 8):
        tb = tb_al
    tb = min(tb, tb_cap)
    n_bt = _cdiv(batch, tb)
    return tb, n_bt


def _run_pallas(x_p, pp, meta, tb, n_bt, use_resident, vmem_limit, single_buffer):
    in_p, h_p, out_p = meta["in_p"], meta["h_p"], meta["out_p"]
    n_blocks = meta["n_blocks"]
    batch_p = x_p.shape[0]

    def spec(shape, index_map, invariant=False):
        if invariant and single_buffer:
            # Grid-invariant operand: a second pipeline buffer is pure VMEM waste.
            return pl.BlockSpec(shape, index_map, pipeline_mode=pl.Buffered(1))
        return pl.BlockSpec(shape, index_map)

    if use_resident:
        grid = (n_bt,)
        in_specs = [
            spec((tb, in_p),            lambda i: (i, 0)),
            spec((in_p, h_p),           lambda i: (0, 0), invariant=True),
            spec((1, h_p),              lambda i: (0, 0), invariant=True),
            spec((n_blocks, h_p, h_p),  lambda i: (0, 0, 0), invariant=True),
            spec((n_blocks, 1, h_p),    lambda i: (0, 0, 0), invariant=True),
            spec((n_blocks, h_p, h_p),  lambda i: (0, 0, 0), invariant=True),
            spec((n_blocks, 1, h_p),    lambda i: (0, 0, 0), invariant=True),
            spec((h_p, out_p),          lambda i: (0, 0), invariant=True),
            spec((1, out_p),            lambda i: (0, 0), invariant=True),
        ]
        out_specs = pl.BlockSpec((tb, out_p), lambda i: (i, 0))
        kernel = functools.partial(_resident_kernel, n_blocks=n_blocks)
        scratch = []
        dims = ("parallel",)
    else:
        grid = (n_bt, n_blocks)
        in_specs = [
            spec((tb, in_p),     lambda i, b: (i, 0)),
            spec((in_p, h_p),    lambda i, b: (0, 0), invariant=True),
            spec((1, h_p),       lambda i, b: (0, 0), invariant=True),
            spec((1, h_p, h_p),  lambda i, b: (b, 0, 0)),
            spec((1, 1, h_p),    lambda i, b: (b, 0, 0)),
            spec((1, h_p, h_p),  lambda i, b: (b, 0, 0)),
            spec((1, 1, h_p),    lambda i, b: (b, 0, 0)),
            spec((h_p, out_p),   lambda i, b: (0, 0), invariant=True),
            spec((1, out_p),     lambda i, b: (0, 0), invariant=True),
        ]
        out_specs = pl.BlockSpec((tb, out_p), lambda i, b: (i, 0))
        kernel = _streaming_kernel
        scratch = [pltpu.VMEM((tb, h_p), jnp.float32)]
        dims = ("parallel", "arbitrary")

    grid_spec = pltpu.PrefetchScalarGridSpec(
        num_scalar_prefetch=0, grid=grid,
        in_specs=in_specs, out_specs=out_specs, scratch_shapes=scratch)

    return pl.pallas_call(
        kernel,
        out_shape=jax.ShapeDtypeStruct((batch_p, out_p), jnp.float32),
        grid_spec=grid_spec,
        compiler_params=pltpu.CompilerParams(
            dimension_semantics=dims,
            vmem_limit_bytes=int(vmem_limit)),
    )(x_p, pp["w_in"], pp["b_in"], pp["w1"], pp["b1"],
      pp["w2"], pp["b2"], pp["w_out"], pp["b_out"])


def resnet_block_forward(x, prepped, meta):
    """Pallas forward for ResNetBlock.  x: (batch, in_dim) f32.  Returns f32."""
    pp = prepped
    in_dim, out_dim = meta["in_dim"], meta["out_dim"]
    in_p, h_p, out_p = meta["in_p"], meta["h_p"], meta["out_p"]
    n_blocks = meta["n_blocks"]
    batch = x.shape[0]

    budget = _vmem_budget_bytes()

    # VMEM sizing (conservative: assumes double-buffering of every operand).
    per_row = 2 * in_p * 2 + 2 * out_p * 4 + 3 * h_p * 4          # x/y tiles + f32 temps
    fixed_common = 2 * (in_p * h_p * 2 + h_p * 4 + h_p * out_p * 2 + out_p * 4)
    blk_bytes = 2 * h_p * h_p * 2 + 2 * h_p * 4                   # w1+w2 (+biases), one block
    fixed_resident = fixed_common + 2 * n_blocks * blk_bytes
    fixed_stream = fixed_common + 2 * blk_bytes

    def max_tb(fixed, per_row_b):
        avail = budget - fixed
        if avail <= 8 * per_row_b:
            return 0
        return min(1024, ((avail // per_row_b) // 8) * 8)

    tb_cap_res = max_tb(fixed_resident, per_row)
    tb_cap_str = max_tb(fixed_stream, per_row + h_p * 4)           # + h_acc scratch

    need_tb = min(_round_up(batch, 8), 256)
    use_resident = tb_cap_res >= need_tb
    tb_cap = tb_cap_res if use_resident else tb_cap_str
    if tb_cap <= 0:
        raise ValueError("hidden dim too large for the VMEM budget")

    tb, n_bt = _choose_batch_tiling(batch, tb_cap)
    batch_p = tb * n_bt

    x_p = jnp.pad(x, ((0, batch_p - batch), (0, in_p - in_dim))).astype(jnp.bfloat16)

    try:
        y_p = _run_pallas(x_p, pp, meta, tb, n_bt, use_resident, budget,
                          single_buffer=True)
        y_p = jax.block_until_ready(y_p)
    except Exception:
        # pipeline_mode=pl.Buffered(1) not supported on this JAX build; retry
        # with default (double) buffering — perf-only difference.
        y_p = _run_pallas(x_p, pp, meta, tb, n_bt, use_resident, budget,
                          single_buffer=False)

    return y_p[:batch, :out_dim]


# --------------------------------------------------------------------------
# Parameters / reference
# --------------------------------------------------------------------------
def init_params(key, in_dim, h_dim, out_dim, n_blocks):
    ks = jax.random.split(key, 8)
    s = 0.05
    return {
        "w_in":  s * jax.random.normal(ks[0], (in_dim, h_dim), jnp.float32),
        "b_in":  s * jax.random.normal(ks[1], (1, h_dim), jnp.float32),
        "w1":    s * jax.random.normal(ks[2], (n_blocks, h_dim, h_dim), jnp.float32),
        "b1":    s * jax.random.normal(ks[3], (n_blocks, 1, h_dim), jnp.float32),
        "w2":    s * jax.random.normal(ks[4], (n_blocks, h_dim, h_dim), jnp.float32),
        "b2":    s * jax.random.normal(ks[5], (n_blocks, 1, h_dim), jnp.float32),
        "w_out": s * jax.random.normal(ks[6], (h_dim, out_dim), jnp.float32),
        "b_out": s * jax.random.normal(ks[7], (1, out_dim), jnp.float32),
    }


def resnet_block_reference(x, params, n_blocks):
    """Pure-JAX f32 reference mirroring the PyTorch module."""
    h = x @ params["w_in"] + params["b_in"]
    for blk in range(n_blocks):
        t = jnp.maximum(h @ params["w1"][blk] + params["b1"][blk], 0.0)
        t = jnp.maximum(t @ params["w2"][blk] + params["b2"][blk], 0.0)
        h = t + h
    return h @ params["w_out"] + params["b_out"]


if __name__ == "__main__":
    batch, in_dim, h_dim, out_dim, n_blocks = 8, 32, 128, 32, 2

    key = jax.random.PRNGKey(0)
    kx, kp = jax.random.split(key)
    x = jax.random.normal(kx, (batch, in_dim), jnp.float32)
    params = init_params(kp, in_dim, h_dim, out_dim, n_blocks)

    prepped, meta = prepare_params(params, n_blocks)   # one-time weight prep
    y = resnet_block_forward(x, prepped, meta)
    y = jax.block_until_ready(y)

    y_ref = resnet_block_reference(x, params, n_blocks)
    assert y.shape == (batch, out_dim)
    # bf16 MXU inputs with f32 accumulation -> tolerance relaxed vs. pure f32.
    assert jnp.allclose(y, y_ref, atol=3e-2, rtol=3e-2), float(
        jnp.max(jnp.abs(y - y_ref)))

    print("KERNEL_OK")
</pallas_src>

<mosaic_0001>
module attributes {stable_mosaic.version = 11 : i64} {
  func.func @_resident_kernel(%arg0: i32, %arg1: memref<8x128xbf16, #tpu.memory_space<vmem>>, %arg2: memref<128x128xbf16, #tpu.memory_space<vmem>>, %arg3: memref<1x128xf32, #tpu.memory_space<vmem>>, %arg4: memref<2x128x128xbf16, #tpu.memory_space<vmem>>, %arg5: memref<2x1x128xf32, #tpu.memory_space<vmem>>, %arg6: memref<2x128x128xbf16, #tpu.memory_space<vmem>>, %arg7: memref<2x1x128xf32, #tpu.memory_space<vmem>>, %arg8: memref<128x128xbf16, #tpu.memory_space<vmem>>, %arg9: memref<1x128xf32, #tpu.memory_space<vmem>>, %arg10: memref<8x128xf32, #tpu.memory_space<vmem>>) attributes {dimension_semantics = [#tpu.dimension_semantics<parallel>], iteration_bounds = array<i64: 1>, scalar_prefetch = 0 : i64, scratch_operands = 0 : i64, tpu.core_type = #tpu.core_type<tc>, window_params = [{transform_indices = @transform_0, window_bounds = array<i64: 8, 128>}, {pipeline_mode = #tpu.pipeline_mode<synchronous>, transform_indices = @transform_1, window_bounds = array<i64: 128, 128>}, {pipeline_mode = #tpu.pipeline_mode<synchronous>, transform_indices = @transform_2, window_bounds = array<i64: 1, 128>}, {pipeline_mode = #tpu.pipeline_mode<synchronous>, transform_indices = @transform_3, window_bounds = array<i64: 2, 128, 128>}, {pipeline_mode = #tpu.pipeline_mode<synchronous>, transform_indices = @transform_4, window_bounds = array<i64: 2, 1, 128>}, {pipeline_mode = #tpu.pipeline_mode<synchronous>, transform_indices = @transform_5, window_bounds = array<i64: 2, 128, 128>}, {pipeline_mode = #tpu.pipeline_mode<synchronous>, transform_indices = @transform_6, window_bounds = array<i64: 2, 1, 128>}, {pipeline_mode = #tpu.pipeline_mode<synchronous>, transform_indices = @transform_7, window_bounds = array<i64: 128, 128>}, {pipeline_mode = #tpu.pipeline_mode<synchronous>, transform_indices = @transform_8, window_bounds = array<i64: 1, 128>}, {transform_indices = @transform_9, window_bounds = array<i64: 8, 128>}]} {
    %c0 = arith.constant 0 : index
    %c0_0 = arith.constant 0 : index
    %0 = vector.load %arg1[%c0, %c0_0] : memref<8x128xbf16, #tpu.memory_space<vmem>>, vector<8x128xbf16>
    %c0_1 = arith.constant 0 : index
    %c0_2 = arith.constant 0 : index
    %1 = vector.load %arg2[%c0_1, %c0_2] : memref<128x128xbf16, #tpu.memory_space<vmem>>, vector<128x128xbf16>
    %cst = arith.constant dense<0.000000e+00> : vector<8x128xf32>
    %2 = tpu.matmul %0, %1, %cst {dimension_numbers = #tpu.dot_dimension_numbers<[1], [0], [0], [1], [0, 0, 1, 1], [], []>} : vector<8x128xbf16>, vector<128x128xbf16>, vector<8x128xf32> -> vector<8x128xf32>
    %c0_3 = arith.constant 0 : index
    %c0_4 = arith.constant 0 : index
    %3 = vector.load %arg3[%c0_3, %c0_4] : memref<1x128xf32, #tpu.memory_space<vmem>>, vector<1x128xf32>
    %4 = vector.broadcast %3 : vector<1x128xf32> to vector<8x128xf32>
    %5 = arith.addf %2, %4 : vector<8x128xf32>
    %6 = arith.truncf %5 : vector<8x128xf32> to vector<8x128xbf16>
    %c0_5 = arith.constant 0 : index
    %c0_6 = arith.constant 0 : index
    %c0_7 = arith.constant 0 : index
    %7 = vector.load %arg4[%c0_5, %c0_6, %c0_7] : memref<2x128x128xbf16, #tpu.memory_space<vmem>>, vector<1x128x128xbf16>
    %8 = vector.shape_cast %7 : vector<1x128x128xbf16> to vector<128x128xbf16>
    %cst_8 = arith.constant dense<0.000000e+00> : vector<8x128xf32>
    %9 = tpu.matmul %6, %8, %cst_8 {dimension_numbers = #tpu.dot_dimension_numbers<[1], [0], [0], [1], [0, 0, 1, 1], [], []>} : vector<8x128xbf16>, vector<128x128xbf16>, vector<8x128xf32> -> vector<8x128xf32>
    %c0_9 = arith.constant 0 : index
    %c0_10 = arith.constant 0 : index
    %c0_11 = arith.constant 0 : index
    %10 = vector.load %arg5[%c0_9, %c0_10, %c0_11] : memref<2x1x128xf32, #tpu.memory_space<vmem>>, vector<1x1x128xf32>
    %11 = vector.shape_cast %10 : vector<1x1x128xf32> to vector<1x128xf32>
    %12 = vector.broadcast %11 : vector<1x128xf32> to vector<8x128xf32>
    %13 = arith.addf %9, %12 : vector<8x128xf32>
    %cst_12 = arith.constant 0.000000e+00 : f32
    %14 = vector.broadcast %cst_12 : f32 to vector<8x128xf32>
    %15 = arith.maximumf %13, %14 : vector<8x128xf32>
    %16 = arith.truncf %15 : vector<8x128xf32> to vector<8x128xbf16>
    %c0_13 = arith.constant 0 : index
    %c0_14 = arith.constant 0 : index
    %c0_15 = arith.constant 0 : index
    %17 = vector.load %arg6[%c0_13, %c0_14, %c0_15] : memref<2x128x128xbf16, #tpu.memory_space<vmem>>, vector<1x128x128xbf16>
    %18 = vector.shape_cast %17 : vector<1x128x128xbf16> to vector<128x128xbf16>
    %cst_16 = arith.constant dense<0.000000e+00> : vector<8x128xf32>
    %19 = tpu.matmul %16, %18, %cst_16 {dimension_numbers = #tpu.dot_dimension_numbers<[1], [0], [0], [1], [0, 0, 1, 1], [], []>} : vector<8x128xbf16>, vector<128x128xbf16>, vector<8x128xf32> -> vector<8x128xf32>
    %c0_17 = arith.constant 0 : index
    %c0_18 = arith.constant 0 : index
    %c0_19 = arith.constant 0 : index
    %20 = vector.load %arg7[%c0_17, %c0_18, %c0_19] : memref<2x1x128xf32, #tpu.memory_space<vmem>>, vector<1x1x128xf32>
    %21 = vector.shape_cast %20 : vector<1x1x128xf32> to vector<1x128xf32>
    %22 = vector.broadcast %21 : vector<1x128xf32> to vector<8x128xf32>
    %23 = arith.addf %19, %22 : vector<8x128xf32>
    %cst_20 = arith.constant 0.000000e+00 : f32
    %24 = vector.broadcast %cst_20 : f32 to vector<8x128xf32>
    %25 = arith.maximumf %23, %24 : vector<8x128xf32>
    %26 = arith.addf %5, %25 : vector<8x128xf32>
    %27 = arith.truncf %26 : vector<8x128xf32> to vector<8x128xbf16>
    %c1 = arith.constant 1 : index
    %c0_21 = arith.constant 0 : index
    %c0_22 = arith.constant 0 : index
    %28 = vector.load %arg4[%c1, %c0_21, %c0_22] : memref<2x128x128xbf16, #tpu.memory_space<vmem>>, vector<1x128x128xbf16>
    %29 = vector.shape_cast %28 : vector<1x128x128xbf16> to vector<128x128xbf16>
    %cst_23 = arith.constant dense<0.000000e+00> : vector<8x128xf32>
    %30 = tpu.matmul %27, %29, %cst_23 {dimension_numbers = #tpu.dot_dimension_numbers<[1], [0], [0], [1], [0, 0, 1, 1], [], []>} : vector<8x128xbf16>, vector<128x128xbf16>, vector<8x128xf32> -> vector<8x128xf32>
    %c1_24 = arith.constant 1 : index
    %c0_25 = arith.constant 0 : index
    %c0_26 = arith.constant 0 : index
    %31 = vector.load %arg5[%c1_24, %c0_25, %c0_26] : memref<2x1x128xf32, #tpu.memory_space<vmem>>, vector<1x1x128xf32>
    %32 = vector.shape_cast %31 : vector<1x1x128xf32> to vector<1x128xf32>
    %33 = vector.broadcast %32 : vector<1x128xf32> to vector<8x128xf32>
    %34 = arith.addf %30, %33 : vector<8x128xf32>
    %cst_27 = arith.constant 0.000000e+00 : f32
    %35 = vector.broadcast %cst_27 : f32 to vector<8x128xf32>
    %36 = arith.maximumf %34, %35 : vector<8x128xf32>
    %37 = arith.truncf %36 : vector<8x128xf32> to vector<8x128xbf16>
    %c1_28 = arith.constant 1 : index
    %c0_29 = arith.constant 0 : index
    %c0_30 = arith.constant 0 : index
    %38 = vector.load %arg6[%c1_28, %c0_29, %c0_30] : memref<2x128x128xbf16, #tpu.memory_space<vmem>>, vector<1x128x128xbf16>
    %39 = vector.shape_cast %38 : vector<1x128x128xbf16> to vector<128x128xbf16>
    %cst_31 = arith.constant dense<0.000000e+00> : vector<8x128xf32>
    %40 = tpu.matmul %37, %39, %cst_31 {dimension_numbers = #tpu.dot_dimension_numbers<[1], [0], [0], [1], [0, 0, 1, 1], [], []>} : vector<8x128xbf16>, vector<128x128xbf16>, vector<8x128xf32> -> vector<8x128xf32>
    %c1_32 = arith.constant 1 : index
    %c0_33 = arith.constant 0 : index
    %c0_34 = arith.constant 0 : index
    %41 = vector.load %arg7[%c1_32, %c0_33, %c0_34] : memref<2x1x128xf32, #tpu.memory_space<vmem>>, vector<1x1x128xf32>
    %42 = vector.shape_cast %41 : vector<1x1x128xf32> to vector<1x128xf32>
    %43 = vector.broadcast %42 : vector<1x128xf32> to vector<8x128xf32>
    %44 = arith.addf %40, %43 : vector<8x128xf32>
    %cst_35 = arith.constant 0.000000e+00 : f32
    %45 = vector.broadcast %cst_35 : f32 to vector<8x128xf32>
    %46 = arith.maximumf %44, %45 : vector<8x128xf32>
    %47 = arith.addf %26, %46 : vector<8x128xf32>
    %48 = arith.truncf %47 : vector<8x128xf32> to vector<8x128xbf16>
    %c0_36 = arith.constant 0 : index
    %c0_37 = arith.constant 0 : index
    %49 = vector.load %arg8[%c0_36, %c0_37] : memref<128x128xbf16, #tpu.memory_space<vmem>>, vector<128x128xbf16>
    %cst_38 = arith.constant dense<0.000000e+00> : vector<8x128xf32>
    %50 = tpu.matmul %48, %49, %cst_38 {dimension_numbers = #tpu.dot_dimension_numbers<[1], [0], [0], [1], [0, 0, 1, 1], [], []>} : vector<8x128xbf16>, vector<128x128xbf16>, vector<8x128xf32> -> vector<8x128xf32>
    %c0_39 = arith.constant 0 : index
    %c0_40 = arith.constant 0 : index
    %51 = vector.load %arg9[%c0_39, %c0_40] : memref<1x128xf32, #tpu.memory_space<vmem>>, vector<1x128xf32>
    %52 = vector.broadcast %51 : vector<1x128xf32> to vector<8x128xf32>
    %53 = arith.addf %50, %52 : vector<8x128xf32>
    %c0_41 = arith.constant 0 : index
    %c0_42 = arith.constant 0 : index
    %54 = vector.load %arg10[%c0_41, %c0_42] : memref<8x128xf32, #tpu.memory_space<vmem>>, vector<8x128xf32>
    tpu.vector_store %arg10[%c0_41, %c0_42], %53 {strides = array<i32>} : memref<8x128xf32, #tpu.memory_space<vmem>>, vector<8x128xf32>,
    return
  }
  func.func @transform_0(%arg0: i32) -> (i32, i32) {
    %c0_i32 = arith.constant 0 : i32
    %c0_i32_0 = arith.constant 0 : i32
    return %arg0, %c0_i32 : i32, i32
  }
  func.func @transform_1(%arg0: i32) -> (i32, i32) {
    %c0_i32 = arith.constant 0 : i32
    %c0_i32_0 = arith.constant 0 : i32
    %c0_i32_1 = arith.constant 0 : i32
    return %c0_i32, %c0_i32_0 : i32, i32
  }
  func.func @transform_2(%arg0: i32) -> (i32, i32) {
    %c0_i32 = arith.constant 0 : i32
    %c0_i32_0 = arith.constant 0 : i32
    %c0_i32_1 = arith.constant 0 : i32
    return %c0_i32, %c0_i32_0 : i32, i32
  }
  func.func @transform_3(%arg0: i32) -> (i32, i32, i32) {
    %c0_i32 = arith.constant 0 : i32
    %c0_i32_0 = arith.constant 0 : i32
    %c0_i32_1 = arith.constant 0 : i32
    %c0_i32_2 = arith.constant 0 : i32
    return %c0_i32, %c0_i32_0, %c0_i32_1 : i32, i32, i32
  }
  func.func @transform_4(%arg0: i32) -> (i32, i32, i32) {
    %c0_i32 = arith.constant 0 : i32
    %c0_i32_0 = arith.constant 0 : i32
    %c0_i32_1 = arith.constant 0 : i32
    %c0_i32_2 = arith.constant 0 : i32
    return %c0_i32, %c0_i32_0, %c0_i32_1 : i32, i32, i32
  }
  func.func @transform_5(%arg0: i32) -> (i32, i32, i32) {
    %c0_i32 = arith.constant 0 : i32
    %c0_i32_0 = arith.constant 0 : i32
    %c0_i32_1 = arith.constant 0 : i32
    %c0_i32_2 = arith.constant 0 : i32
    return %c0_i32, %c0_i32_0, %c0_i32_1 : i32, i32, i32
  }
  func.func @transform_6(%arg0: i32) -> (i32, i32, i32) {
    %c0_i32 = arith.constant 0 : i32
    %c0_i32_0 = arith.constant 0 : i32
    %c0_i32_1 = arith.constant 0 : i32
    %c0_i32_2 = arith.constant 0 : i32
    return %c0_i32, %c0_i32_0, %c0_i32_1 : i32, i32, i32
  }
  func.func @transform_7(%arg0: i32) -> (i32, i32) {
    %c0_i32 = arith.constant 0 : i32
    %c0_i32_0 = arith.constant 0 : i32
    %c0_i32_1 = arith.constant 0 : i32
    return %c0_i32, %c0_i32_0 : i32, i32
  }
  func.func @transform_8(%arg0: i32) -> (i32, i32) {
    %c0_i32 = arith.constant 0 : i32
    %c0_i32_0 = arith.constant 0 : i32
    %c0_i32_1 = arith.constant 0 : i32
    return %c0_i32, %c0_i32_0 : i32, i32
  }
  func.func @transform_9(%arg0: i32) -> (i32, i32) {
    %c0_i32 = arith.constant 0 : i32
    %c0_i32_0 = arith.constant 0 : i32
    return %arg0, %c0_i32 : i32, i32
  }
}

module attributes {stable_mosaic.version = 11 : i64} {
  func.func @_resident_kernel(%arg0: i32, %arg1: memref<8x128xbf16, #tpu.memory_space<vmem>>, %arg2: memref<128x128xbf16, #tpu.memory_space<vmem>>, %arg3: memref<1x128xf32, #tpu.memory_space<vmem>>, %arg4: memref<2x128x128xbf16, #tpu.memory_space<vmem>>, %arg5: memref<2x1x128xf32, #tpu.memory_space<vmem>>, %arg6: memref<2x128x128xbf16, #tpu.memory_space<vmem>>, %arg7: memref<2x1x128xf32, #tpu.memory_space<vmem>>, %arg8: memref<128x128xbf16, #tpu.memory_space<vmem>>, %arg9: memref<1x128xf32, #tpu.memory_space<vmem>>, %arg10: memref<8x128xf32, #tpu.memory_space<vmem>>) attributes {dimension_semantics = [#tpu.dimension_semantics<parallel>], iteration_bounds = array<i64: 1>, scalar_prefetch = 0 : i64, scratch_operands = 0 : i64, tpu.core_type = #tpu.core_type<tc>, window_params = [{transform_indices = @transform_0, window_bounds = array<i64: 8, 128>}, {pipeline_mode = #tpu.pipeline_mode<synchronous>, transform_indices = @transform_1, window_bounds = array<i64: 128, 128>}, {pipeline_mode = #tpu.pipeline_mode<synchronous>, transform_indices = @transform_2, window_bounds = array<i64: 1, 128>}, {pipeline_mode = #tpu.pipeline_mode<synchronous>, transform_indices = @transform_3, window_bounds = array<i64: 2, 128, 128>}, {pipeline_mode = #tpu.pipeline_mode<synchronous>, transform_indices = @transform_4, window_bounds = array<i64: 2, 1, 128>}, {pipeline_mode = #tpu.pipeline_mode<synchronous>, transform_indices = @transform_5, window_bounds = array<i64: 2, 128, 128>}, {pipeline_mode = #tpu.pipeline_mode<synchronous>, transform_indices = @transform_6, window_bounds = array<i64: 2, 1, 128>}, {pipeline_mode = #tpu.pipeline_mode<synchronous>, transform_indices = @transform_7, window_bounds = array<i64: 128, 128>}, {pipeline_mode = #tpu.pipeline_mode<synchronous>, transform_indices = @transform_8, window_bounds = array<i64: 1, 128>}, {transform_indices = @transform_9, window_bounds = array<i64: 8, 128>}]} {
    %c0 = arith.constant 0 : index
    %c0_0 = arith.constant 0 : index
    %0 = vector.load %arg1[%c0, %c0_0] : memref<8x128xbf16, #tpu.memory_space<vmem>>, vector<8x128xbf16>
    %c0_1 = arith.constant 0 : index
    %c0_2 = arith.constant 0 : index
    %1 = vector.load %arg2[%c0_1, %c0_2] : memref<128x128xbf16, #tpu.memory_space<vmem>>, vector<128x128xbf16>
    %cst = arith.constant dense<0.000000e+00> : vector<8x128xf32>
    %2 = tpu.matmul %0, %1, %cst {dimension_numbers = #tpu.dot_dimension_numbers<[1], [0], [0], [1], [0, 0, 1, 1], [], []>} : vector<8x128xbf16>, vector<128x128xbf16>, vector<8x128xf32> -> vector<8x128xf32>
    %c0_3 = arith.constant 0 : index
    %c0_4 = arith.constant 0 : index
    %3 = vector.load %arg3[%c0_3, %c0_4] : memref<1x128xf32, #tpu.memory_space<vmem>>, vector<1x128xf32>
    %4 = vector.broadcast %3 : vector<1x128xf32> to vector<8x128xf32>
    %5 = arith.addf %2, %4 : vector<8x128xf32>
    %6 = arith.truncf %5 : vector<8x128xf32> to vector<8x128xbf16>
    %c0_5 = arith.constant 0 : index
    %c0_6 = arith.constant 0 : index
    %c0_7 = arith.constant 0 : index
    %7 = vector.load %arg4[%c0_5, %c0_6, %c0_7] : memref<2x128x128xbf16, #tpu.memory_space<vmem>>, vector<1x128x128xbf16>
    %8 = vector.shape_cast %7 : vector<1x128x128xbf16> to vector<128x128xbf16>
    %cst_8 = arith.constant dense<0.000000e+00> : vector<8x128xf32>
    %9 = tpu.matmul %6, %8, %cst_8 {dimension_numbers = #tpu.dot_dimension_numbers<[1], [0], [0], [1], [0, 0, 1, 1], [], []>} : vector<8x128xbf16>, vector<128x128xbf16>, vector<8x128xf32> -> vector<8x128xf32>
    %c0_9 = arith.constant 0 : index
    %c0_10 = arith.constant 0 : index
    %c0_11 = arith.constant 0 : index
    %10 = vector.load %arg5[%c0_9, %c0_10, %c0_11] : memref<2x1x128xf32, #tpu.memory_space<vmem>>, vector<1x1x128xf32>
    %11 = vector.shape_cast %10 : vector<1x1x128xf32> to vector<1x128xf32>
    %12 = vector.broadcast %11 : vector<1x128xf32> to vector<8x128xf32>
    %13 = arith.addf %9, %12 : vector<8x128xf32>
    %cst_12 = arith.constant 0.000000e+00 : f32
    %14 = vector.broadcast %cst_12 : f32 to vector<8x128xf32>
    %15 = arith.maximumf %13, %14 : vector<8x128xf32>
    %16 = arith.truncf %15 : vector<8x128xf32> to vector<8x128xbf16>
    %c0_13 = arith.constant 0 : index
    %c0_14 = arith.constant 0 : index
    %c0_15 = arith.constant 0 : index
    %17 = vector.load %arg6[%c0_13, %c0_14, %c0_15] : memref<2x128x128xbf16, #tpu.memory_space<vmem>>, vector<1x128x128xbf16>
    %18 = vector.shape_cast %17 : vector<1x128x128xbf16> to vector<128x128xbf16>
    %cst_16 = arith.constant dense<0.000000e+00> : vector<8x128xf32>
    %19 = tpu.matmul %16, %18, %cst_16 {dimension_numbers = #tpu.dot_dimension_numbers<[1], [0], [0], [1], [0, 0, 1, 1], [], []>} : vector<8x128xbf16>, vector<128x128xbf16>, vector<8x128xf32> -> vector<8x128xf32>
    %c0_17 = arith.constant 0 : index
    %c0_18 = arith.constant 0 : index
    %c0_19 = arith.constant 0 : index
    %20 = vector.load %arg7[%c0_17, %c0_18, %c0_19] : memref<2x1x128xf32, #tpu.memory_space<vmem>>, vector<1x1x128xf32>
    %21 = vector.shape_cast %20 : vector<1x1x128xf32> to vector<1x128xf32>
    %22 = vector.broadcast %21 : vector<1x128xf32> to vector<8x128xf32>
    %23 = arith.addf %19, %22 : vector<8x128xf32>
    %cst_20 = arith.constant 0.000000e+00 : f32
    %24 = vector.broadcast %cst_20 : f32 to vector<8x128xf32>
    %25 = arith.maximumf %23, %24 : vector<8x128xf32>
    %26 = arith.addf %5, %25 : vector<8x128xf32>
    %27 = arith.truncf %26 : vector<8x128xf32> to vector<8x128xbf16>
    %c1 = arith.constant 1 : index
    %c0_21 = arith.constant 0 : index
    %c0_22 = arith.constant 0 : index
    %28 = vector.load %arg4[%c1, %c0_21, %c0_22] : memref<2x128x128xbf16, #tpu.memory_space<vmem>>, vector<1x128x128xbf16>
    %29 = vector.shape_cast %28 : vector<1x128x128xbf16> to vector<128x128xbf16>
    %cst_23 = arith.constant dense<0.000000e+00> : vector<8x128xf32>
    %30 = tpu.matmul %27, %29, %cst_23 {dimension_numbers = #tpu.dot_dimension_numbers<[1], [0], [0], [1], [0, 0, 1, 1], [], []>} : vector<8x128xbf16>, vector<128x128xbf16>, vector<8x128xf32> -> vector<8x128xf32>
    %c1_24 = arith.constant 1 : index
    %c0_25 = arith.constant 0 : index
    %c0_26 = arith.constant 0 : index
    %31 = vector.load %arg5[%c1_24, %c0_25, %c0_26] : memref<2x1x128xf32, #tpu.memory_space<vmem>>, vector<1x1x128xf32>
    %32 = vector.shape_cast %31 : vector<1x1x128xf32> to vector<1x128xf32>
    %33 = vector.broadcast %32 : vector<1x128xf32> to vector<8x128xf32>
    %34 = arith.addf %30, %33 : vector<8x128xf32>
    %cst_27 = arith.constant 0.000000e+00 : f32
    %35 = vector.broadcast %cst_27 : f32 to vector<8x128xf32>
    %36 = arith.maximumf %34, %35 : vector<8x128xf32>
    %37 = arith.truncf %36 : vector<8x128xf32> to vector<8x128xbf16>
    %c1_28 = arith.constant 1 : index
    %c0_29 = arith.constant 0 : index
    %c0_30 = arith.constant 0 : index
    %38 = vector.load %arg6[%c1_28, %c0_29, %c0_30] : memref<2x128x128xbf16, #tpu.memory_space<vmem>>, vector<1x128x128xbf16>
    %39 = vector.shape_cast %38 : vector<1x128x128xbf16> to vector<128x128xbf16>
    %cst_31 = arith.constant dense<0.000000e+00> : vector<8x128xf32>
    %40 = tpu.matmul %37, %39, %cst_31 {dimension_numbers = #tpu.dot_dimension_numbers<[1], [0], [0], [1], [0, 0, 1, 1], [], []>} : vector<8x128xbf16>, vector<128x128xbf16>, vector<8x128xf32> -> vector<8x128xf32>
    %c1_32 = arith.constant 1 : index
    %c0_33 = arith.constant 0 : index
    %c0_34 = arith.constant 0 : index
    %41 = vector.load %arg7[%c1_32, %c0_33, %c0_34] : memref<2x1x128xf32, #tpu.memory_space<vmem>>, vector<1x1x128xf32>
    %42 = vector.shape_cast %41 : vector<1x1x128xf32> to vector<1x128xf32>
    %43 = vector.broadcast %42 : vector<1x128xf32> to vector<8x128xf32>
    %44 = arith.addf %40, %43 : vector<8x128xf32>
    %cst_35 = arith.constant 0.000000e+00 : f32
    %45 = vector.broadcast %cst_35 : f32 to vector<8x128xf32>
    %46 = arith.maximumf %44, %45 : vector<8x128xf32>
    %47 = arith.addf %26, %46 : vector<8x128xf32>
    %48 = arith.truncf %47 : vector<8x128xf32> to vector<8x128xbf16>
    %c0_36 = arith.constant 0 : index
    %c0_37 = arith.constant 0 : index
    %49 = vector.load %arg8[%c0_36, %c0_37] : memref<128x128xbf16, #tpu.memory_space<vmem>>, vector<128x128xbf16>
    %cst_38 = arith.constant dense<0.000000e+00> : vector<8x128xf32>
    %50 = tpu.matmul %48, %49, %cst_38 {dimension_numbers = #tpu.dot_dimension_numbers<[1], [0], [0], [1], [0, 0, 1, 1], [], []>} : vector<8x128xbf16>, vector<128x128xbf16>, vector<8x128xf32> -> vector<8x128xf32>
    %c0_39 = arith.constant 0 : index
    %c0_40 = arith.constant 0 : index
    %51 = vector.load %arg9[%c0_39, %c0_40] : memref<1x128xf32, #tpu.memory_space<vmem>>, vector<1x128xf32>
    %52 = vector.broadcast %51 : vector<1x128xf32> to vector<8x128xf32>
    %53 = arith.addf %50, %52 : vector<8x128xf32>
    %c0_41 = arith.constant 0 : index
    %c0_42 = arith.constant 0 : index
    %54 = vector.load %arg10[%c0_41, %c0_42] : memref<8x128xf32, #tpu.memory_space<vmem>>, vector<8x128xf32>
    tpu.vector_store %arg10[%c0_41, %c0_42], %53 {strides = array<i32>} : memref<8x128xf32, #tpu.memory_space<vmem>>, vector<8x128xf32>,
    return
  }
  func.func @transform_0(%arg0: i32) -> (i32, i32) {
    %c0_i32 = arith.constant 0 : i32
    %c0_i32_0 = arith.constant 0 : i32
    return %arg0, %c0_i32 : i32, i32
  }
  func.func @transform_1(%arg0: i32) -> (i32, i32) {
    %c0_i32 = arith.constant 0 : i32
    %c0_i32_0 = arith.constant 0 : i32
    %c0_i32_1 = arith.constant 0 : i32
    return %c0_i32, %c0_i32_0 : i32, i32
  }
  func.func @transform_2(%arg0: i32) -> (i32, i32) {
    %c0_i32 = arith.constant 0 : i32
    %c0_i32_0 = arith.constant 0 : i32
    %c0_i32_1 = arith.constant 0 : i32
    return %c0_i32, %c0_i32_0 : i32, i32
  }
  func.func @transform_3(%arg0: i32) -> (i32, i32, i32) {
    %c0_i32 = arith.constant 0 : i32
    %c0_i32_0 = arith.constant 0 : i32
    %c0_i32_1 = arith.constant 0 : i32
    %c0_i32_2 = arith.constant 0 : i32
    return %c0_i32, %c0_i32_0, %c0_i32_1 : i32, i32, i32
  }
  func.func @transform_4(%arg0: i32) -> (i32, i32, i32) {
    %c0_i32 = arith.constant 0 : i32
    %c0_i32_0 = arith.constant 0 : i32
    %c0_i32_1 = arith.constant 0 : i32
    %c0_i32_2 = arith.constant 0 : i32
    return %c0_i32, %c0_i32_0, %c0_i32_1 : i32, i32, i32
  }
  func.func @transform_5(%arg0: i32) -> (i32, i32, i32) {
    %c0_i32 = arith.constant 0 : i32
    %c0_i32_0 = arith.constant 0 : i32
    %c0_i32_1 = arith.constant 0 : i32
    %c0_i32_2 = arith.constant 0 : i32
    return %c0_i32, %c0_i32_0, %c0_i32_1 : i32, i32, i32
  }
  func.func @transform_6(%arg0: i32) -> (i32, i32, i32) {
    %c0_i32 = arith.constant 0 : i32
    %c0_i32_0 = arith.constant 0 : i32
    %c0_i32_1 = arith.constant 0 : i32
    %c0_i32_2 = arith.constant 0 : i32
    return %c0_i32, %c0_i32_0, %c0_i32_1 : i32, i32, i32
  }
  func.func @transform_7(%arg0: i32) -> (i32, i32) {
    %c0_i32 = arith.constant 0 : i32
    %c0_i32_0 = arith.constant 0 : i32
    %c0_i32_1 = arith.constant 0 : i32
    return %c0_i32, %c0_i32_0 : i32, i32
  }
  func.func @transform_8(%arg0: i32) -> (i32, i32) {
    %c0_i32 = arith.constant 0 : i32
    %c0_i32_0 = arith.constant 0 : i32
    %c0_i32_1 = arith.constant 0 : i32
    return %c0_i32, %c0_i32_0 : i32, i32
  }
  func.func @transform_9(%arg0: i32) -> (i32, i32) {
    %c0_i32 = arith.constant 0 : i32
    %c0_i32_0 = arith.constant 0 : i32
    return %arg0, %c0_i32 : i32, i32
  }
}

</mosaic_0001>

<llo_original>
// kernel: tpu_custom_call.1
$region0: #{tpu_custom_call.1}
  #allocation0 [shape = 'u32[]', space=smem, size = 0x4, offset = 0x4, fixed_abs, tag = 'smem constant byte address 0x4 - core index']
  #allocation1 [shape = 'u32[144,128]{1,0:T(1,128)}', space=vmem, size = 0x12000, scoped, tag = 'internal scratch']
  %s0 = inlined_call_operand.hbm [shape: bf16[8,128], index: 0, kind: input, shape index: {}]
  %s1 = inlined_call_operand.hbm [shape: bf16[128,128], index: 1, kind: input, shape index: {}]
  %s2 = inlined_call_operand.vmem [shape: f32[1,128], index: 2, kind: input, shape index: {}]
  %s3 = inlined_call_operand.hbm [shape: bf16[2,128,128], index: 3, kind: input, shape index: {}]
  %s4 = inlined_call_operand.vmem [shape: f32[2,1,128], index: 4, kind: input, shape index: {}]
  %s5 = inlined_call_operand.hbm [shape: bf16[2,128,128], index: 5, kind: input, shape index: {}]
  %s6 = inlined_call_operand.vmem [shape: f32[2,1,128], index: 6, kind: input, shape index: {}]
  %s7 = inlined_call_operand.hbm [shape: bf16[128,128], index: 7, kind: input, shape index: {}]
  %s8 = inlined_call_operand.vmem [shape: f32[1,128], index: 8, kind: input, shape index: {}]
  %s9 = inlined_call_operand.hbm [shape: f32[8,128], index: 9, kind: output, shape index: {}]
  %s10 = sld [smem:[#allocation0]]
  $region66: #{tpu_custom_call.1} parent=0
    _
  %s12 = ssub.s32 1, %s10
  %s13 = scalar_select 0, %s12, %s10
  $region1: #{tpu_custom_call.1} parent=0
    #allocation2 [shape = 'u8[2048]{0}', space=vmem, size = 0x800, scoped, tag = 'input window, operand 0, single buffered']
    #allocation3 [shape = 's32[1]{0}', space=sflag, size = 0x4, scoped, tag = 'scoped memory for tpu_custom_call.1']
    #allocation4 [shape = 's32[1]{0}', space=sflag, size = 0x4, scoped, tag = 'scoped memory for tpu_custom_call.1']
    #allocation5 [shape = 'u8[32768]{0}', space=vmem, size = 0x8000, scoped, tag = 'input window, operand 1, single buffered']
    #allocation6 [shape = 's32[1]{0}', space=sflag, size = 0x4, scoped, tag = 'scoped memory for tpu_custom_call.1']
    #allocation7 [shape = 'u8[65536]{0}', space=vmem, size = 0x10000, scoped, tag = 'input window, operand 3, single buffered']
    #allocation8 [shape = 'u8[65536]{0}', space=vmem, size = 0x10000, scoped, tag = 'input window, operand 5, single buffered']
    #allocation9 [shape = 's32[1]{0}', space=sflag, size = 0x4, scoped, tag = 'scoped memory for tpu_custom_call.1']
    #allocation10 [shape = 'u8[32768]{0}', space=vmem, size = 0x8000, scoped, tag = 'input window, operand 7, single buffered']
    #allocation11 [shape = 'u8[4096]{0}', space=vmem, size = 0x1000, scoped, tag = 'output window, operand 0, single buffered']
    %14 = vsyncpa [#allocation3], 0
    %15 = vsyncpa [#allocation6], 0
    %16 = vsyncpa [#allocation9], 0
    %17 = vsyncpa [#allocation4], 0
    // Predicated region
    $region2: #{tpu_custom_call.1} parent=1 // pred_check
      _
    $region3: #{tpu_custom_call.1} parent=1 // pred_check_branch
      %19 = sbr.rel (0) target = $region5
    $region4: #{tpu_custom_call.1} parent=1 // pred_region
      %s21 = ssub.s32 64, 64
      %22 = vsyncadd [#allocation3], %s21
      %s24 = sshll.u32 [#allocation2], 4
      %s25 = int_to_ptr.vmem [resolvable:$true] %s24
      %27 = dma.hbm_to_vmem [thread:$0]  %s0, 64, %s25, [#allocation3]
    $region5: #{tpu_custom_call.1} parent=1 // pred_fallthru
      _
    // Predicated region
    $region6: #{tpu_custom_call.1} parent=1 // pred_check
      _
    $region7: #{tpu_custom_call.1} parent=1 // pred_check_branch
      %29 = sbr.rel (0) target = $region9
    $region8: #{tpu_custom_call.1} parent=1 // pred_region
      %s31 = ssub.s32 1024, 1024
      %32 = vsyncadd [#allocation6], %s31
      %s33 = sshll.u32 [#allocation5], 4
      %s34 = int_to_ptr.vmem [resolvable:$true] %s33
      %39 = dma.hbm_to_vmem [thread:$0]  %s1, 1024, %s34, [#allocation6], 64, 64, 4
    $region9: #{tpu_custom_call.1} parent=1 // pred_fallthru
      _
    // Predicated region
    $region10: #{tpu_custom_call.1} parent=1 // pred_check
      _
    $region11: #{tpu_custom_call.1} parent=1 // pred_check_branch
      %41 = sbr.rel (0) target = $region13
    $region12: #{tpu_custom_call.1} parent=1 // pred_region
      _
    $region13: #{tpu_custom_call.1} parent=1 // pred_fallthru
      _
    // Predicated region
    $region14: #{tpu_custom_call.1} parent=1 // pred_check
      _
    $region15: #{tpu_custom_call.1} parent=1 // pred_check_branch
      %43 = sbr.rel (0) target = $region17
    $region16: #{tpu_custom_call.1} parent=1 // pred_region
      %s45 = ssub.s32 2048, 2048
      %46 = vsyncadd [#allocation6], %s45
      %s47 = sshll.u32 [#allocation7], 4
      %s48 = int_to_ptr.vmem [resolvable:$true] %s47
      %53 = dma.hbm_to_vmem [thread:$0]  %s3, 2048, %s48, [#allocation6], 64, 64, 4
    $region17: #{tpu_custom_call.1} parent=1 // pred_fallthru
      _
    // Predicated region
    $region18: #{tpu_custom_call.1} parent=1 // pred_check
      _
    $region19: #{tpu_custom_call.1} parent=1 // pred_check_branch
      %55 = sbr.rel (0) target = $region21
    $region20: #{tpu_custom_call.1} parent=1 // pred_region
      _
    $region21: #{tpu_custom_call.1} parent=1 // pred_fallthru
      _
    // Predicated region
    $region22: #{tpu_custom_call.1} parent=1 // pred_check
      _
    $region23: #{tpu_custom_call.1} parent=1 // pred_check_branch
      %57 = sbr.rel (0) target = $region25
    $region24: #{tpu_custom_call.1} parent=1 // pred_region
      %s59 = ssub.s32 2048, 2048
      %60 = vsyncadd [#allocation9], %s59
      %s61 = sshll.u32 [#allocation8], 4
      %s62 = int_to_ptr.vmem [resolvable:$true] %s61
      %67 = dma.hbm_to_vmem [thread:$0]  %s5, 2048, %s62, [#allocation9], 64, 64, 4
    $region25: #{tpu_custom_call.1} parent=1 // pred_fallthru
      _
    // Predicated region
    $region26: #{tpu_custom_call.1} parent=1 // pred_check
      _
    $region27: #{tpu_custom_call.1} parent=1 // pred_check_branch
      %69 = sbr.rel (0) target = $region29
    $region28: #{tpu_custom_call.1} parent=1 // pred_region
      _
    $region29: #{tpu_custom_call.1} parent=1 // pred_fallthru
      _
    // Predicated region
    $region30: #{tpu_custom_call.1} parent=1 // pred_check
      _
    $region31: #{tpu_custom_call.1} parent=1 // pred_check_branch
      %71 = sbr.rel (0) target = $region33
    $region32: #{tpu_custom_call.1} parent=1 // pred_region
      %s73 = ssub.s32 1024, 1024
      %74 = vsyncadd [#allocation9], %s73
      %s75 = sshll.u32 [#allocation10], 4
      %s76 = int_to_ptr.vmem [resolvable:$true] %s75
      %81 = dma.hbm_to_vmem [thread:$0]  %s7, 1024, %s76, [#allocation9], 64, 64, 4
    $region33: #{tpu_custom_call.1} parent=1 // pred_fallthru
      _
    // Predicated region
    $region34: #{tpu_custom_call.1} parent=1 // pred_check
      _
    $region35: #{tpu_custom_call.1} parent=1 // pred_check_branch
      %83 = sbr.rel (0) target = $region37
    $region36: #{tpu_custom_call.1} parent=1 // pred_region
      _
    $region37: #{tpu_custom_call.1} parent=1 // pred_fallthru
      _
    // Predicated region
    $region38: #{tpu_custom_call.1} parent=1 // pred_check
      _
    $region39: #{tpu_custom_call.1} parent=1 // pred_check_branch
      %85 = sbr.rel (0) target = $region41
    $region40: #{tpu_custom_call.1} parent=1 // pred_region
      %86 = dma.done [#allocation3], 64
    $region41: #{tpu_custom_call.1} parent=1 // pred_fallthru
      _
    // Predicated region
    $region42: #{tpu_custom_call.1} parent=1 // pred_check
      _
    $region43: #{tpu_custom_call.1} parent=1 // pred_check_branch
      %88 = sbr.rel (0) target = $region45
    $region44: #{tpu_custom_call.1} parent=1 // pred_region
      %89 = dma.done [#allocation6], 1024
    $region45: #{tpu_custom_call.1} parent=1 // pred_fallthru
      _
    // Predicated region
    $region46: #{tpu_custom_call.1} parent=1 // pred_check
      _
    $region47: #{tpu_custom_call.1} parent=1 // pred_check_branch
      %91 = sbr.rel (0) target = $region49
    $region48: #{tpu_custom_call.1} parent=1 // pred_region
      %92 = dma.done [#allocation6], 2048
    $region49: #{tpu_custom_call.1} parent=1 // pred_fallthru
      _
    // Predicated region
    $region50: #{tpu_custom_call.1} parent=1 // pred_check
      _
    $region51: #{tpu_custom_call.1} parent=1 // pred_check_branch
      %94 = sbr.rel (0) target = $region53
    $region52: #{tpu_custom_call.1} parent=1 // pred_region
      %95 = dma.done [#allocation9], 2048
    $region53: #{tpu_custom_call.1} parent=1 // pred_fallthru
      _
    // Predicated region
    $region54: #{tpu_custom_call.1} parent=1 // pred_check
      _
    $region55: #{tpu_custom_call.1} parent=1 // pred_check_branch
      %97 = sbr.rel (0) target = $region57
    $region56: #{tpu_custom_call.1} parent=1 // pred_region
      %98 = dma.done [#allocation9], 1024
    $region57: #{tpu_custom_call.1} parent=1 // pred_fallthru
      _
    %v100 = vld [vmem:[#allocation2] sm:$0xf]
    %v101 = vld [vmem:[#allocation5] sm:$0xf]
    %v102 = vld [vmem:[#allocation5 + $0x4] sm:$0xf]
    %v103 = vld [vmem:[#allocation5 + $0x8] sm:$0xf]
    %v104 = vld [vmem:[#allocation5 + $0xc] sm:$0xf]
    %v105 = vld [vmem:[#allocation5 + $0x10] sm:$0xf]
    %v106 = vld [vmem:[#allocation5 + $0x14] sm:$0xf]
    %v107 = vld [vmem:[#allocation5 + $0x18] sm:$0xf]
    %v108 = vld [vmem:[#allocation5 + $0x1c] sm:$0xf]
    %v109 = vld [vmem:[#allocation5 + $0x20] sm:$0xf]
    %v110 = vld [vmem:[#allocation5 + $0x24] sm:$0xf]
    %v111 = vld [vmem:[#allocation5 + $0x28] sm:$0xf]
    %v112 = vld [vmem:[#allocation5 + $0x2c] sm:$0xf]
    %v113 = vld [vmem:[#allocation5 + $0x30] sm:$0xf]
    %v114 = vld [vmem:[#allocation5 + $0x34] sm:$0xf]
    %v115 = vld [vmem:[#allocation5 + $0x38] sm:$0xf]
    %v116 = vld [vmem:[#allocation5 + $0x3c] sm:$0xf]
    %v117 = vld [vmem:[%s2] sm:$0x1]
    %v119 = vlaneseq
    %v120 = vshrl.u32 %v119, 7
    %v121 = vsub.s32 0, %v120
    %v122 = vrot.slane %v117, %v121
    %v140 = vunpack.c.l.b16 %v101
    %v141 = vunpack.c.l.b16 %v102
    %v142 = vunpack.c.l.b16 %v103
    %v143 = vunpack.c.l.b16 %v104
    %v144 = vunpack.c.l.b16 %v105
    %v145 = vunpack.c.l.b16 %v106
    %v146 = vunpack.c.l.b16 %v107
    %v147 = vunpack.c.l.b16 %v108
    %v148 = vunpack.c.l.b16 %v109
    %v149 = vunpack.c.l.b16 %v110
    %v150 = vunpack.c.l.b16 %v111
    %v151 = vunpack.c.l.b16 %v112
    %v152 = vunpack.c.l.b16 %v113
    %v153 = vunpack.c.l.b16 %v114
    %v154 = vunpack.c.l.b16 %v115
    %v155 = vunpack.c.l.b16 %v116
    %v156 = vpack.c.b16 %v141, %v140
    %v157 = vpack.c.b16 %v143, %v142
    %v158 = vpack.c.b16 %v145, %v144
    %v159 = vpack.c.b16 %v147, %v146
    %v160 = vpack.c.b16 %v149, %v148
    %v161 = vpack.c.b16 %v151, %v150
    %v162 = vpack.c.b16 %v153, %v152
    %v163 = vpack.c.b16 %v155, %v154
    %172 = vmatprep.subr.bf16.mxu0 0
    %173 = vmatpush1.bf16.msra.mxu0 %v163
    %174 = vmatprep.subr.bf16.mxu0 0
    %175 = vmatpush1.bf16.msra.mxu0 %v162
    %176 = vmatprep.subr.bf16.mxu0 0
    %177 = vmatpush1.bf16.msra.mxu0 %v161
    %178 = vmatprep.subr.bf16.mxu0 0
    %179 = vmatpush1.bf16.msra.mxu0 %v160
    %180 = vmatprep.subr.bf16.mxu0 0
    %181 = vmatpush1.bf16.msra.mxu0 %v159
    %182 = vmatprep.subr.bf16.mxu0 0
    %183 = vmatpush1.bf16.msra.mxu0 %v158
    %184 = vmatprep.subr.bf16.mxu0 0
    %185 = vmatpush1.bf16.msra.mxu0 %v157
    %186 = vmatprep.subr.bf16.mxu0 0
    %187 = vmatpush1.bf16.msra.mxu0 %v156
    %188 = vmatprep.subr.bf16.mxu0 0
    %189 = vmatpush2.bf16.msra.mxu0 0
    %190 = vmatprep.subr.bf16.mxu0 0
    %191 = vmatpush2.bf16.msra.mxu0 0
    %192 = vmatprep.subr.bf16.mxu0 0
    %193 = vmatpush2.bf16.msra.mxu0 0
    %194 = vmatprep.subr.bf16.mxu0 0
    %195 = vmatpush2.bf16.msra.mxu0 0
    %196 = vmatprep.subr.bf16.mxu0 0
    %197 = vmatpush2.bf16.msra.mxu0 0
    %198 = vmatprep.subr.bf16.mxu0 0
    %199 = vmatpush2.bf16.msra.mxu0 0
    %200 = vmatprep.subr.bf16.mxu0 0
    %201 = vmatpush2.bf16.msra.mxu0 0
    %202 = vmatprep.subr.bf16.mxu0 0
    %203 = vmatpush2.bf16.msra.mxu0 0
    %204 = vmatprep.mubr.bf16.mxu0 0
    %205 = vmatmul.mubr.bf16.gmra.mxu0 %v100
    %v206 = vpop.f32.mrf.mxu0
    %v207 = vadd.f32 %v122, %v206
    %v208 = vpop.f32.mrf.mxu0
    %v209 = vpop.f32.mrf.mxu0
    %v210 = vpop.f32.mrf.mxu0
    %211 = vdwg.mxu0
    %v212 = vpack.c.bf16 %v207, %v207
    %v213 = vld [vmem:[#allocation7] sm:$0xf]
    %v214 = vld [vmem:[#allocation7 + $0x4] sm:$0xf]
    %v215 = vld [vmem:[#allocation7 + $0x8] sm:$0xf]
    %v216 = vld [vmem:[#allocation7 + $0xc] sm:$0xf]
    %v217 = vld [vmem:[#allocation7 + $0x10] sm:$0xf]
    %v218 = vld [vmem:[#allocation7 + $0x14] sm:$0xf]
    %v219 = vld [vmem:[#allocation7 + $0x18] sm:$0xf]
    %v220 = vld [vmem:[#allocation7 + $0x1c] sm:$0xf]
    %v221 = vld [vmem:[#allocation7 + $0x20] sm:$0xf]
    %v222 = vld [vmem:[#allocation7 + $0x24] sm:$0xf]
    %v223 = vld [vmem:[#allocation7 + $0x28] sm:$0xf]
    %v224 = vld [vmem:[#allocation7 + $0x2c] sm:$0xf]
    %v225 = vld [vmem:[#allocation7 + $0x30] sm:$0xf]
    %v226 = vld [vmem:[#allocation7 + $0x34] sm:$0xf]
    %v227 = vld [vmem:[#allocation7 + $0x38] sm:$0xf]
    %v228 = vld [vmem:[#allocation7 + $0x3c] sm:$0xf]
    %v229 = vld [vmem:[%s4] sm:$0x1]
    %v231 = vlaneseq
    %v232 = vshrl.u32 %v231, 7
    %v233 = vsub.s32 0, %v232
    %v234 = vrot.slane %v229, %v233
    %v252 = vunpack.c.l.b16 %v213
    %v253 = vunpack.c.l.b16 %v214
    %v254 = vunpack.c.l.b16 %v215
    %v255 = vunpack.c.l.b16 %v216
    %v256 = vunpack.c.l.b16 %v217
    %v257 = vunpack.c.l.b16 %v218
    %v258 = vunpack.c.l.b16 %v219
    %v259 = vunpack.c.l.b16 %v220
    %v260 = vunpack.c.l.b16 %v221
    %v261 = vunpack.c.l.b16 %v222
    %v262 = vunpack.c.l.b16 %v223
    %v263 = vunpack.c.l.b16 %v224
    %v264 = vunpack.c.l.b16 %v225
    %v265 = vunpack.c.l.b16 %v226
    %v266 = vunpack.c.l.b16 %v227
    %v267 = vunpack.c.l.b16 %v228
    %v268 = vpack.c.b16 %v253, %v252
    %v269 = vpack.c.b16 %v255, %v254
    %v270 = vpack.c.b16 %v257, %v256
    %v271 = vpack.c.b16 %v259, %v258
    %v272 = vpack.c.b16 %v261, %v260
    %v273 = vpack.c.b16 %v263, %v262
    %v274 = vpack.c.b16 %v265, %v264
    %v275 = vpack.c.b16 %v267, %v266
    %284 = vmatprep.subr.bf16.mxu0 0
    %285 = vmatpush1.bf16.msra.mxu0 %v275
    %286 = vmatprep.subr.bf16.mxu0 0
    %287 = vmatpush1.bf16.msra.mxu0 %v274
    %288 = vmatprep.subr.bf16.mxu0 0
    %289 = vmatpush1.bf16.msra.mxu0 %v273
    %290 = vmatprep.subr.bf16.mxu0 0
    %291 = vmatpush1.bf16.msra.mxu0 %v272
    %292 = vmatprep.subr.bf16.mxu0 0
    %293 = vmatpush1.bf16.msra.mxu0 %v271
    %294 = vmatprep.subr.bf16.mxu0 0
    %295 = vmatpush1.bf16.msra.mxu0 %v270
    %296 = vmatprep.subr.bf16.mxu0 0
    %297 = vmatpush1.bf16.msra.mxu0 %v269
    %298 = vmatprep.subr.bf16.mxu0 0
    %299 = vmatpush1.bf16.msra.mxu0 %v268
    %300 = vmatprep.subr.bf16.mxu0 0
    %301 = vmatpush2.bf16.msra.mxu0 0
    %302 = vmatprep.subr.bf16.mxu0 0
    %303 = vmatpush2.bf16.msra.mxu0 0
    %304 = vmatprep.subr.bf16.mxu0 0
    %305 = vmatpush2.bf16.msra.mxu0 0
    %306 = vmatprep.subr.bf16.mxu0 0
    %307 = vmatpush2.bf16.msra.mxu0 0
    %308 = vmatprep.subr.bf16.mxu0 0
    %309 = vmatpush2.bf16.msra.mxu0 0
    %310 = vmatprep.subr.bf16.mxu0 0
    %311 = vmatpush2.bf16.msra.mxu0 0
    %312 = vmatprep.subr.bf16.mxu0 0
    %313 = vmatpush2.bf16.msra.mxu0 0
    %314 = vmatprep.subr.bf16.mxu0 0
    %315 = vmatpush2.bf16.msra.mxu0 0
    %316 = vmatprep.mubr.bf16.mxu0 0
    %317 = vmatmul.mubr.bf16.gmra.mxu0 %v212
    %v318 = vpop.f32.mrf.mxu0
    %v319 = vadd.f32 %v234, %v318
    %v320 = vpop.f32.mrf.mxu0
    %v321 = vpop.f32.mrf.mxu0
    %v322 = vpop.f32.mrf.mxu0
    %323 = vdwg.mxu0
    %v324 = vmax.f32 %v319, 0.0
    %v325 = vpack.c.bf16 %v324, %v324
    %v326 = vld [vmem:[#allocation8] sm:$0xf]
    %v327 = vld [vmem:[#allocation8 + $0x4] sm:$0xf]
    %v328 = vld [vmem:[#allocation8 + $0x8] sm:$0xf]
    %v329 = vld [vmem:[#allocation8 + $0xc] sm:$0xf]
    %v330 = vld [vmem:[#allocation8 + $0x10] sm:$0xf]
    %v331 = vld [vmem:[#allocation8 + $0x14] sm:$0xf]
    %v332 = vld [vmem:[#allocation8 + $0x18] sm:$0xf]
    %v333 = vld [vmem:[#allocation8 + $0x1c] sm:$0xf]
    %v334 = vld [vmem:[#allocation8 + $0x20] sm:$0xf]
    %v335 = vld [vmem:[#allocation8 + $0x24] sm:$0xf]
    %v336 = vld [vmem:[#allocation8 + $0x28] sm:$0xf]
    %v337 = vld [vmem:[#allocation8 + $0x2c] sm:$0xf]
    %v338 = vld [vmem:[#allocation8 + $0x30] sm:$0xf]
    %v339 = vld [vmem:[#allocation8 + $0x34] sm:$0xf]
    %v340 = vld [vmem:[#allocation8 + $0x38] sm:$0xf]
    %v341 = vld [vmem:[#allocation8 + $0x3c] sm:$0xf]
    %v342 = vld [vmem:[%s6] sm:$0x1]
    %v344 = vlaneseq
    %v345 = vshrl.u32 %v344, 7
    %v346 = vsub.s32 0, %v345
    %v347 = vrot.slane %v342, %v346
    %v365 = vunpack.c.l.b16 %v326
    %v366 = vunpack.c.l.b16 %v327
    %v367 = vunpack.c.l.b16 %v328
    %v368 = vunpack.c.l.b16 %v329
    %v369 = vunpack.c.l.b16 %v330
    %v370 = vunpack.c.l.b16 %v331
    %v371 = vunpack.c.l.b16 %v332
    %v372 = vunpack.c.l.b16 %v333
    %v373 = vunpack.c.l.b16 %v334
    %v374 = vunpack.c.l.b16 %v335
    %v375 = vunpack.c.l.b16 %v336
    %v376 = vunpack.c.l.b16 %v337
    %v377 = vunpack.c.l.b16 %v338
    %v378 = vunpack.c.l.b16 %v339
    %v379 = vunpack.c.l.b16 %v340
    %v380 = vunpack.c.l.b16 %v341
    %v381 = vpack.c.b16 %v366, %v365
    %v382 = vpack.c.b16 %v368, %v367
    %v383 = vpack.c.b16 %v370, %v369
    %v384 = vpack.c.b16 %v372, %v371
    %v385 = vpack.c.b16 %v374, %v373
    %v386 = vpack.c.b16 %v376, %v375
    %v387 = vpack.c.b16 %v378, %v377
    %v388 = vpack.c.b16 %v380, %v379
    %397 = vmatprep.subr.bf16.mxu0 0
    %398 = vmatpush1.bf16.msra.mxu0 %v388
    %399 = vmatprep.subr.bf16.mxu0 0
    %400 = vmatpush1.bf16.msra.mxu0 %v387
    %401 = vmatprep.subr.bf16.mxu0 0
    %402 = vmatpush1.bf16.msra.mxu0 %v386
    %403 = vmatprep.subr.bf16.mxu0 0
    %404 = vmatpush1.bf16.msra.mxu0 %v385
    %405 = vmatprep.subr.bf16.mxu0 0
    %406 = vmatpush1.bf16.msra.mxu0 %v384
    %407 = vmatprep.subr.bf16.mxu0 0
    %408 = vmatpush1.bf16.msra.mxu0 %v383
    %409 = vmatprep.subr.bf16.mxu0 0
    %410 = vmatpush1.bf16.msra.mxu0 %v382
    %411 = vmatprep.subr.bf16.mxu0 0
    %412 = vmatpush1.bf16.msra.mxu0 %v381
    %413 = vmatprep.subr.bf16.mxu0 0
    %414 = vmatpush2.bf16.msra.mxu0 0
    %415 = vmatprep.subr.bf16.mxu0 0
    %416 = vmatpush2.bf16.msra.mxu0 0
    %417 = vmatprep.subr.bf16.mxu0 0
    %418 = vmatpush2.bf16.msra.mxu0 0
    %419 = vmatprep.subr.bf16.mxu0 0
    %420 = vmatpush2.bf16.msra.mxu0 0
    %421 = vmatprep.subr.bf16.mxu0 0
    %422 = vmatpush2.bf16.msra.mxu0 0
    %423 = vmatprep.subr.bf16.mxu0 0
    %424 = vmatpush2.bf16.msra.mxu0 0
    %425 = vmatprep.subr.bf16.mxu0 0
    %426 = vmatpush2.bf16.msra.mxu0 0
    %427 = vmatprep.subr.bf16.mxu0 0
    %428 = vmatpush2.bf16.msra.mxu0 0
    %429 = vmatprep.mubr.bf16.mxu0 0
    %430 = vmatmul.mubr.bf16.gmra.mxu0 %v325
    %v431 = vpop.f32.mrf.mxu0
    %v432 = vadd.f32 %v347, %v431
    %v433 = vpop.f32.mrf.mxu0
    %v434 = vpop.f32.mrf.mxu0
    %v435 = vpop.f32.mrf.mxu0
    %436 = vdwg.mxu0
    %v437 = vmax.f32 %v432, 0.0
    %v438 = vadd.f32 %v207, %v437
    %v439 = vpack.c.bf16 %v438, %v438
    %s440 = scalar_lea.vmem [#allocation7], 64
    %v441 = vld [vmem:[%s440] sm:$0xf]
    %v442 = vld [vmem:[%s440 + $0x4] sm:$0xf]
    %v443 = vld [vmem:[%s440 + $0x8] sm:$0xf]
    %v444 = vld [vmem:[%s440 + $0xc] sm:$0xf]
    %v445 = vld [vmem:[%s440 + $0x10] sm:$0xf]
    %v446 = vld [vmem:[%s440 + $0x14] sm:$0xf]
    %v447 = vld [vmem:[%s440 + $0x18] sm:$0xf]
    %v448 = vld [vmem:[%s440 + $0x1c] sm:$0xf]
    %v449 = vld [vmem:[%s440 + $0x20] sm:$0xf]
    %v450 = vld [vmem:[%s440 + $0x24] sm:$0xf]
    %v451 = vld [vmem:[%s440 + $0x28] sm:$0xf]
    %v452 = vld [vmem:[%s440 + $0x2c] sm:$0xf]
    %v453 = vld [vmem:[%s440 + $0x30] sm:$0xf]
    %v454 = vld [vmem:[%s440 + $0x34] sm:$0xf]
    %v455 = vld [vmem:[%s440 + $0x38] sm:$0xf]
    %v456 = vld [vmem:[%s440 + $0x3c] sm:$0xf]
    %s457 = scalar_lea.vmem %s4, 1
    %v458 = vld [vmem:[%s457] sm:$0x1]
    %v460 = vlaneseq
    %v461 = vshrl.u32 %v460, 7
    %v462 = vsub.s32 0, %v461
    %v463 = vrot.slane %v458, %v462
    %v481 = vunpack.c.l.b16 %v441
    %v482 = vunpack.c.l.b16 %v442
    %v483 = vunpack.c.l.b16 %v443
    %v484 = vunpack.c.l.b16 %v444
    %v485 = vunpack.c.l.b16 %v445
    %v486 = vunpack.c.l.b16 %v446
    %v487 = vunpack.c.l.b16 %v447
    %v488 = vunpack.c.l.b16 %v448
    %v489 = vunpack.c.l.b16 %v449
    %v490 = vunpack.c.l.b16 %v450
    %v491 = vunpack.c.l.b16 %v451
    %v492 = vunpack.c.l.b16 %v452
    %v493 = vunpack.c.l.b16 %v453
    %v494 = vunpack.c.l.b16 %v454
    %v495 = vunpack.c.l.b16 %v455
    %v496 = vunpack.c.l.b16 %v456
    %v497 = vpack.c.b16 %v482, %v481
    %v498 = vpack.c.b16 %v484, %v483
    %v499 = vpack.c.b16 %v486, %v485
    %v500 = vpack.c.b16 %v488, %v487
    %v501 = vpack.c.b16 %v490, %v489
    %v502 = vpack.c.b16 %v492, %v491
    %v503 = vpack.c.b16 %v494, %v493
    %v504 = vpack.c.b16 %v496, %v495
    %513 = vmatprep.subr.bf16.mxu0 0
    %514 = vmatpush1.bf16.msra.mxu0 %v504
    %515 = vmatprep.subr.bf16.mxu0 0
    %516 = vmatpush1.bf16.msra.mxu0 %v503
    %517 = vmatprep.subr.bf16.mxu0 0
    %518 = vmatpush1.bf16.msra.mxu0 %v502
    %519 = vmatprep.subr.bf16.mxu0 0
    %520 = vmatpush1.bf16.msra.mxu0 %v501
    %521 = vmatprep.subr.bf16.mxu0 0
    %522 = vmatpush1.bf16.msra.mxu0 %v500
    %523 = vmatprep.subr.bf16.mxu0 0
    %524 = vmatpush1.bf16.msra.mxu0 %v499
    %525 = vmatprep.subr.bf16.mxu0 0
    %526 = vmatpush1.bf16.msra.mxu0 %v498
    %527 = vmatprep.subr.bf16.mxu0 0
    %528 = vmatpush1.bf16.msra.mxu0 %v497
    %529 = vmatprep.subr.bf16.mxu0 0
    %530 = vmatpush2.bf16.msra.mxu0 0
    %531 = vmatprep.subr.bf16.mxu0 0
    %532 = vmatpush2.bf16.msra.mxu0 0
    %533 = vmatprep.subr.bf16.mxu0 0
    %534 = vmatpush2.bf16.msra.mxu0 0
    %535 = vmatprep.subr.bf16.mxu0 0
    %536 = vmatpush2.bf16.msra.mxu0 0
    %537 = vmatprep.subr.bf16.mxu0 0
    %538 = vmatpush2.bf16.msra.mxu0 0
    %539 = vmatprep.subr.bf16.mxu0 0
    %540 = vmatpush2.bf16.msra.mxu0 0
    %541 = vmatprep.subr.bf16.mxu0 0
    %542 = vmatpush2.bf16.msra.mxu0 0
    %543 = vmatprep.subr.bf16.mxu0 0
    %544 = vmatpush2.bf16.msra.mxu0 0
    %545 = vmatprep.mubr.bf16.mxu0 0
    %546 = vmatmul.mubr.bf16.gmra.mxu0 %v439
    %v547 = vpop.f32.mrf.mxu0
    %v548 = vadd.f32 %v463, %v547
    %v549 = vpop.f32.mrf.mxu0
    %v550 = vpop.f32.mrf.mxu0
    %v551 = vpop.f32.mrf.mxu0
    %552 = vdwg.mxu0
    %v553 = vmax.f32 %v548, 0.0
    %v554 = vpack.c.bf16 %v553, %v553
    %s555 = scalar_lea.vmem [#allocation8], 64
    %v556 = vld [vmem:[%s555] sm:$0xf]
    %v557 = vld [vmem:[%s555 + $0x4] sm:$0xf]
    %v558 = vld [vmem:[%s555 + $0x8] sm:$0xf]
    %v559 = vld [vmem:[%s555 + $0xc] sm:$0xf]
    %v560 = vld [vmem:[%s555 + $0x10] sm:$0xf]
    %v561 = vld [vmem:[%s555 + $0x14] sm:$0xf]
    %v562 = vld [vmem:[%s555 + $0x18] sm:$0xf]
    %v563 = vld [vmem:[%s555 + $0x1c] sm:$0xf]
    %v564 = vld [vmem:[%s555 + $0x20] sm:$0xf]
    %v565 = vld [vmem:[%s555 + $0x24] sm:$0xf]
    %v566 = vld [vmem:[%s555 + $0x28] sm:$0xf]
    %v567 = vld [vmem:[%s555 + $0x2c] sm:$0xf]
    %v568 = vld [vmem:[%s555 + $0x30] sm:$0xf]
    %v569 = vld [vmem:[%s555 + $0x34] sm:$0xf]
    %v570 = vld [vmem:[%s555 + $0x38] sm:$0xf]
    %v571 = vld [vmem:[%s555 + $0x3c] sm:$0xf]
    %s572 = scalar_lea.vmem %s6, 1
    %v573 = vld [vmem:[%s572] sm:$0x1]
    %v575 = vlaneseq
    %v576 = vshrl.u32 %v575, 7
    %v577 = vsub.s32 0, %v576
    %v578 = vrot.slane %v573, %v577
    %v596 = vunpack.c.l.b16 %v556
    %v597 = vunpack.c.l.b16 %v557
    %v598 = vunpack.c.l.b16 %v558
    %v599 = vunpack.c.l.b16 %v559
    %v600 = vunpack.c.l.b16 %v560
    %v601 = vunpack.c.l.b16 %v561
    %v602 = vunpack.c.l.b16 %v562
    %v603 = vunpack.c.l.b16 %v563
    %v604 = vunpack.c.l.b16 %v564
    %v605 = vunpack.c.l.b16 %v565
    %v606 = vunpack.c.l.b16 %v566
    %v607 = vunpack.c.l.b16 %v567
    %v608 = vunpack.c.l.b16 %v568
    %v609 = vunpack.c.l.b16 %v569
    %v610 = vunpack.c.l.b16 %v570
    %v611 = vunpack.c.l.b16 %v571
    %v612 = vpack.c.b16 %v597, %v596
    %v613 = vpack.c.b16 %v599, %v598
    %v614 = vpack.c.b16 %v601, %v600
    %v615 = vpack.c.b16 %v603, %v602
    %v616 = vpack.c.b16 %v605, %v604
    %v617 = vpack.c.b16 %v607, %v606
    %v618 = vpack.c.b16 %v609, %v608
    %v619 = vpack.c.b16 %v611, %v610
    %628 = vmatprep.subr.bf16.mxu0 0
    %629 = vmatpush1.bf16.msra.mxu0 %v619
    %630 = vmatprep.subr.bf16.mxu0 0
    %631 = vmatpush1.bf16.msra.mxu0 %v618
    %632 = vmatprep.subr.bf16.mxu0 0
    %633 = vmatpush1.bf16.msra.mxu0 %v617
    %634 = vmatprep.subr.bf16.mxu0 0
    %635 = vmatpush1.bf16.msra.mxu0 %v616
    %636 = vmatprep.subr.bf16.mxu0 0
    %637 = vmatpush1.bf16.msra.mxu0 %v615
    %638 = vmatprep.subr.bf16.mxu0 0
    %639 = vmatpush1.bf16.msra.mxu0 %v614
    %640 = vmatprep.subr.bf16.mxu0 0
    %641 = vmatpush1.bf16.msra.mxu0 %v613
    %642 = vmatprep.subr.bf16.mxu0 0
    %643 = vmatpush1.bf16.msra.mxu0 %v612
    %644 = vmatprep.subr.bf16.mxu0 0
    %645 = vmatpush2.bf16.msra.mxu0 0
    %646 = vmatprep.subr.bf16.mxu0 0
    %647 = vmatpush2.bf16.msra.mxu0 0
    %648 = vmatprep.subr.bf16.mxu0 0
    %649 = vmatpush2.bf16.msra.mxu0 0
    %650 = vmatprep.subr.bf16.mxu0 0
    %651 = vmatpush2.bf16.msra.mxu0 0
    %652 = vmatprep.subr.bf16.mxu0 0
    %653 = vmatpush2.bf16.msra.mxu0 0
    %654 = vmatprep.subr.bf16.mxu0 0
    %655 = vmatpush2.bf16.msra.mxu0 0
    %656 = vmatprep.subr.bf16.mxu0 0
    %657 = vmatpush2.bf16.msra.mxu0 0
    %658 = vmatprep.subr.bf16.mxu0 0
    %659 = vmatpush2.bf16.msra.mxu0 0
    %660 = vmatprep.mubr.bf16.mxu0 0
    %661 = vmatmul.mubr.bf16.gmra.mxu0 %v554
    %v662 = vpop.f32.mrf.mxu0
    %v663 = vadd.f32 %v578, %v662
    %v664 = vpop.f32.mrf.mxu0
    %v665 = vpop.f32.mrf.mxu0
    %v666 = vpop.f32.mrf.mxu0
    %667 = vdwg.mxu0
    %v668 = vmax.f32 %v663, 0.0
    %v669 = vadd.f32 %v438, %v668
    %v670 = vpack.c.bf16 %v669, %v669
    %v671 = vld [vmem:[#allocation10] sm:$0xf]
    %v672 = vld [vmem:[#allocation10 + $0x4] sm:$0xf]
    %v673 = vld [vmem:[#allocation10 + $0x8] sm:$0xf]
    %v674 = vld [vmem:[#allocation10 + $0xc] sm:$0xf]
    %v675 = vld [vmem:[#allocation10 + $0x10] sm:$0xf]
    %v676 = vld [vmem:[#allocation10 + $0x14] sm:$0xf]
    %v677 = vld [vmem:[#allocation10 + $0x18] sm:$0xf]
    %v678 = vld [vmem:[#allocation10 + $0x1c] sm:$0xf]
    %v679 = vld [vmem:[#allocation10 + $0x20] sm:$0xf]
    %v680 = vld [vmem:[#allocation10 + $0x24] sm:$0xf]
    %v681 = vld [vmem:[#allocation10 + $0x28] sm:$0xf]
    %v682 = vld [vmem:[#allocation10 + $0x2c] sm:$0xf]
    %v683 = vld [vmem:[#allocation10 + $0x30] sm:$0xf]
    %v684 = vld [vmem:[#allocation10 + $0x34] sm:$0xf]
    %v685 = vld [vmem:[#allocation10 + $0x38] sm:$0xf]
    %v686 = vld [vmem:[#allocation10 + $0x3c] sm:$0xf]
    %v687 = vld [vmem:[%s8] sm:$0x1]
    %v689 = vlaneseq
    %v690 = vshrl.u32 %v689, 7
    %v691 = vsub.s32 0, %v690
    %v692 = vrot.slane %v687, %v691
    %v710 = vunpack.c.l.b16 %v671
    %v711 = vunpack.c.l.b16 %v672
    %v712 = vunpack.c.l.b16 %v673
    %v713 = vunpack.c.l.b16 %v674
    %v714 = vunpack.c.l.b16 %v675
    %v715 = vunpack.c.l.b16 %v676
    %v716 = vunpack.c.l.b16 %v677
    %v717 = vunpack.c.l.b16 %v678
    %v718 = vunpack.c.l.b16 %v679
    %v719 = vunpack.c.l.b16 %v680
    %v720 = vunpack.c.l.b16 %v681
    %v721 = vunpack.c.l.b16 %v682
    %v722 = vunpack.c.l.b16 %v683
    %v723 = vunpack.c.l.b16 %v684
    %v724 = vunpack.c.l.b16 %v685
    %v725 = vunpack.c.l.b16 %v686
    %v726 = vpack.c.b16 %v711, %v710
    %v727 = vpack.c.b16 %v713, %v712
    %v728 = vpack.c.b16 %v715, %v714
    %v729 = vpack.c.b16 %v717, %v716
    %v730 = vpack.c.b16 %v719, %v718
    %v731 = vpack.c.b16 %v721, %v720
    %v732 = vpack.c.b16 %v723, %v722
    %v733 = vpack.c.b16 %v725, %v724
    %742 = vmatprep.subr.bf16.mxu0 0
    %743 = vmatpush1.bf16.msra.mxu0 %v733
    %744 = vmatprep.subr.bf16.mxu0 0
    %745 = vmatpush1.bf16.msra.mxu0 %v732
    %746 = vmatprep.subr.bf16.mxu0 0
    %747 = vmatpush1.bf16.msra.mxu0 %v731
    %748 = vmatprep.subr.bf16.mxu0 0
    %749 = vmatpush1.bf16.msra.mxu0 %v730
    %750 = vmatprep.subr.bf16.mxu0 0
    %751 = vmatpush1.bf16.msra.mxu0 %v729
    %752 = vmatprep.subr.bf16.mxu0 0
    %753 = vmatpush1.bf16.msra.mxu0 %v728
    %754 = vmatprep.subr.bf16.mxu0 0
    %755 = vmatpush1.bf16.msra.mxu0 %v727
    %756 = vmatprep.subr.bf16.mxu0 0
    %757 = vmatpush1.bf16.msra.mxu0 %v726
    %758 = vmatprep.subr.bf16.mxu0 0
    %759 = vmatpush2.bf16.msra.mxu0 0
    %760 = vmatprep.subr.bf16.mxu0 0
    %761 = vmatpush2.bf16.msra.mxu0 0
    %762 = vmatprep.subr.bf16.mxu0 0
    %763 = vmatpush2.bf16.msra.mxu0 0
    %764 = vmatprep.subr.bf16.mxu0 0
    %765 = vmatpush2.bf16.msra.mxu0 0
    %766 = vmatprep.subr.bf16.mxu0 0
    %767 = vmatpush2.bf16.msra.mxu0 0
    %768 = vmatprep.subr.bf16.mxu0 0
    %769 = vmatpush2.bf16.msra.mxu0 0
    %770 = vmatprep.subr.bf16.mxu0 0
    %771 = vmatpush2.bf16.msra.mxu0 0
    %772 = vmatprep.subr.bf16.mxu0 0
    %773 = vmatpush2.bf16.msra.mxu0 0
    %774 = vmatprep.mubr.bf16.mxu0 0
    %775 = vmatmul.mubr.bf16.gmra.mxu0 %v670
    %v776 = vpop.f32.mrf.mxu0
    %v777 = vadd.f32 %v692, %v776
    %v778 = vpop.f32.mrf.mxu0
    %v779 = vpop.f32.mrf.mxu0
    %v780 = vpop.f32.mrf.mxu0
    %781 = vdwg.mxu0
    %782 = vst [vmem:[#allocation11] sm:$0xff] %v777
    // Predicated region
    $region58: #{tpu_custom_call.1} parent=1 // pred_check
      _
    $region59: #{tpu_custom_call.1} parent=1 // pred_check_branch
      %784 = sbr.rel (0) target = $region61
    $region60: #{tpu_custom_call.1} parent=1 // pred_region
      %s786 = ssub.s32 128, 128
      %787 = vsyncadd [#allocation4], %s786
      %s789 = sshll.u32 [#allocation11], 4
      %s790 = int_to_ptr.vmem [resolvable:$true] %s789
      %792 = dma.vmem_to_hbm [thread:$0]  %s790, 128, %s9, [#allocation4]
    $region61: #{tpu_custom_call.1} parent=1 // pred_fallthru
      _
    // Predicated region
    $region62: #{tpu_custom_call.1} parent=1 // pred_check
      _
    $region63: #{tpu_custom_call.1} parent=1 // pred_check_branch
      %794 = sbr.rel (0) target = $region65
    $region64: #{tpu_custom_call.1} parent=1 // pred_region
      %795 = dma.done [#allocation4], 128
    $region65: #{tpu_custom_call.1} parent=1 // pred_fallthru
      _
    %796 = vsyncpa [#allocation3], 1
    %797 = vsyncpa [#allocation6], 1
    %798 = vsyncpa [#allocation9], 1
    %799 = vsyncpa [#allocation4], 1

// kernel: tpu_custom_call.1
$region0: #{tpu_custom_call.1}
  #allocation0 [shape = 'u32[]', space=smem, size = 0x4, offset = 0x4, fixed_abs, tag = 'smem constant byte address 0x4 - core index']
  #allocation1 [shape = 'u32[144,128]{1,0:T(1,128)}', space=vmem, size = 0x12000, scoped, tag = 'internal scratch']
  %s0 = inlined_call_operand.hbm [shape: bf16[8,128], index: 0, kind: input, shape index: {}]
  %s1 = inlined_call_operand.hbm [shape: bf16[128,128], index: 1, kind: input, shape index: {}]
  %s2 = inlined_call_operand.vmem [shape: f32[1,128], index: 2, kind: input, shape index: {}]
  %s3 = inlined_call_operand.hbm [shape: bf16[2,128,128], index: 3, kind: input, shape index: {}]
  %s4 = inlined_call_operand.vmem [shape: f32[2,1,128], index: 4, kind: input, shape index: {}]
  %s5 = inlined_call_operand.hbm [shape: bf16[2,128,128], index: 5, kind: input, shape index: {}]
  %s6 = inlined_call_operand.vmem [shape: f32[2,1,128], index: 6, kind: input, shape index: {}]
  %s7 = inlined_call_operand.hbm [shape: bf16[128,128], index: 7, kind: input, shape index: {}]
  %s8 = inlined_call_operand.vmem [shape: f32[1,128], index: 8, kind: input, shape index: {}]
  %s9 = inlined_call_operand.hbm [shape: f32[8,128], index: 9, kind: output, shape index: {}]
  %s10 = sld [smem:[#allocation0]]
  $region66: #{tpu_custom_call.1} parent=0
    _
  %s12 = ssub.s32 1, %s10
  %s13 = scalar_select 0, %s12, %s10
  $region1: #{tpu_custom_call.1} parent=0
    #allocation2 [shape = 'u8[2048]{0}', space=vmem, size = 0x800, scoped, tag = 'input window, operand 0, single buffered']
    #allocation3 [shape = 's32[1]{0}', space=sflag, size = 0x4, scoped, tag = 'scoped memory for tpu_custom_call.1']
    #allocation4 [shape = 's32[1]{0}', space=sflag, size = 0x4, scoped, tag = 'scoped memory for tpu_custom_call.1']
    #allocation5 [shape = 'u8[32768]{0}', space=vmem, size = 0x8000, scoped, tag = 'input window, operand 1, single buffered']
    #allocation6 [shape = 's32[1]{0}', space=sflag, size = 0x4, scoped, tag = 'scoped memory for tpu_custom_call.1']
    #allocation7 [shape = 'u8[65536]{0}', space=vmem, size = 0x10000, scoped, tag = 'input window, operand 3, single buffered']
    #allocation8 [shape = 'u8[65536]{0}', space=vmem, size = 0x10000, scoped, tag = 'input window, operand 5, single buffered']
    #allocation9 [shape = 's32[1]{0}', space=sflag, size = 0x4, scoped, tag = 'scoped memory for tpu_custom_call.1']
    #allocation10 [shape = 'u8[32768]{0}', space=vmem, size = 0x8000, scoped, tag = 'input window, operand 7, single buffered']
    #allocation11 [shape = 'u8[4096]{0}', space=vmem, size = 0x1000, scoped, tag = 'output window, operand 0, single buffered']
    %14 = vsyncpa [#allocation3], 0
    %15 = vsyncpa [#allocation6], 0
    %16 = vsyncpa [#allocation9], 0
    %17 = vsyncpa [#allocation4], 0
    // Predicated region
    $region2: #{tpu_custom_call.1} parent=1 // pred_check
      _
    $region3: #{tpu_custom_call.1} parent=1 // pred_check_branch
      %19 = sbr.rel (0) target = $region5
    $region4: #{tpu_custom_call.1} parent=1 // pred_region
      %s21 = ssub.s32 64, 64
      %22 = vsyncadd [#allocation3], %s21
      %s24 = sshll.u32 [#allocation2], 4
      %s25 = int_to_ptr.vmem [resolvable:$true] %s24
      %27 = dma.hbm_to_vmem [thread:$0]  %s0, 64, %s25, [#allocation3]
    $region5: #{tpu_custom_call.1} parent=1 // pred_fallthru
      _
    // Predicated region
    $region6: #{tpu_custom_call.1} parent=1 // pred_check
      _
    $region7: #{tpu_custom_call.1} parent=1 // pred_check_branch
      %29 = sbr.rel (0) target = $region9
    $region8: #{tpu_custom_call.1} parent=1 // pred_region
      %s31 = ssub.s32 1024, 1024
      %32 = vsyncadd [#allocation6], %s31
      %s33 = sshll.u32 [#allocation5], 4
      %s34 = int_to_ptr.vmem [resolvable:$true] %s33
      %39 = dma.hbm_to_vmem [thread:$0]  %s1, 1024, %s34, [#allocation6], 64, 64, 4
    $region9: #{tpu_custom_call.1} parent=1 // pred_fallthru
      _
    // Predicated region
    $region10: #{tpu_custom_call.1} parent=1 // pred_check
      _
    $region11: #{tpu_custom_call.1} parent=1 // pred_check_branch
      %41 = sbr.rel (0) target = $region13
    $region12: #{tpu_custom_call.1} parent=1 // pred_region
      _
    $region13: #{tpu_custom_call.1} parent=1 // pred_fallthru
      _
    // Predicated region
    $region14: #{tpu_custom_call.1} parent=1 // pred_check
      _
    $region15: #{tpu_custom_call.1} parent=1 // pred_check_branch
      %43 = sbr.rel (0) target = $region17
    $region16: #{tpu_custom_call.1} parent=1 // pred_region
      %s45 = ssub.s32 2048, 2048
      %46 = vsyncadd [#allocation6], %s45
      %s47 = sshll.u32 [#allocation7], 4
      %s48 = int_to_ptr.vmem [resolvable:$true] %s47
      %53 = dma.hbm_to_vmem [thread:$0]  %s3, 2048, %s48, [#allocation6], 64, 64, 4
    $region17: #{tpu_custom_call.1} parent=1 // pred_fallthru
      _
    // Predicated region
    $region18: #{tpu_custom_call.1} parent=1 // pred_check
      _
    $region19: #{tpu_custom_call.1} parent=1 // pred_check_branch
      %55 = sbr.rel (0) target = $region21
    $region20: #{tpu_custom_call.1} parent=1 // pred_region
      _
    $region21: #{tpu_custom_call.1} parent=1 // pred_fallthru
      _
    // Predicated region
    $region22: #{tpu_custom_call.1} parent=1 // pred_check
      _
    $region23: #{tpu_custom_call.1} parent=1 // pred_check_branch
      %57 = sbr.rel (0) target = $region25
    $region24: #{tpu_custom_call.1} parent=1 // pred_region
      %s59 = ssub.s32 2048, 2048
      %60 = vsyncadd [#allocation9], %s59
      %s61 = sshll.u32 [#allocation8], 4
      %s62 = int_to_ptr.vmem [resolvable:$true] %s61
      %67 = dma.hbm_to_vmem [thread:$0]  %s5, 2048, %s62, [#allocation9], 64, 64, 4
    $region25: #{tpu_custom_call.1} parent=1 // pred_fallthru
      _
    // Predicated region
    $region26: #{tpu_custom_call.1} parent=1 // pred_check
      _
    $region27: #{tpu_custom_call.1} parent=1 // pred_check_branch
      %69 = sbr.rel (0) target = $region29
    $region28: #{tpu_custom_call.1} parent=1 // pred_region
      _
    $region29: #{tpu_custom_call.1} parent=1 // pred_fallthru
      _
    // Predicated region
    $region30: #{tpu_custom_call.1} parent=1 // pred_check
      _
    $region31: #{tpu_custom_call.1} parent=1 // pred_check_branch
      %71 = sbr.rel (0) target = $region33
    $region32: #{tpu_custom_call.1} parent=1 // pred_region
      %s73 = ssub.s32 1024, 1024
      %74 = vsyncadd [#allocation9], %s73
      %s75 = sshll.u32 [#allocation10], 4
      %s76 = int_to_ptr.vmem [resolvable:$true] %s75
      %81 = dma.hbm_to_vmem [thread:$0]  %s7, 1024, %s76, [#allocation9], 64, 64, 4
    $region33: #{tpu_custom_call.1} parent=1 // pred_fallthru
      _
    // Predicated region
    $region34: #{tpu_custom_call.1} parent=1 // pred_check
      _
    $region35: #{tpu_custom_call.1} parent=1 // pred_check_branch
      %83 = sbr.rel (0) target = $region37
    $region36: #{tpu_custom_call.1} parent=1 // pred_region
      _
    $region37: #{tpu_custom_call.1} parent=1 // pred_fallthru
      _
    // Predicated region
    $region38: #{tpu_custom_call.1} parent=1 // pred_check
      _
    $region39: #{tpu_custom_call.1} parent=1 // pred_check_branch
      %85 = sbr.rel (0) target = $region41
    $region40: #{tpu_custom_call.1} parent=1 // pred_region
      %86 = dma.done [#allocation3], 64
    $region41: #{tpu_custom_call.1} parent=1 // pred_fallthru
      _
    // Predicated region
    $region42: #{tpu_custom_call.1} parent=1 // pred_check
      _
    $region43: #{tpu_custom_call.1} parent=1 // pred_check_branch
      %88 = sbr.rel (0) target = $region45
    $region44: #{tpu_custom_call.1} parent=1 // pred_region
      %89 = dma.done [#allocation6], 1024
    $region45: #{tpu_custom_call.1} parent=1 // pred_fallthru
      _
    // Predicated region
    $region46: #{tpu_custom_call.1} parent=1 // pred_check
      _
    $region47: #{tpu_custom_call.1} parent=1 // pred_check_branch
      %91 = sbr.rel (0) target = $region49
    $region48: #{tpu_custom_call.1} parent=1 // pred_region
      %92 = dma.done [#allocation6], 2048
    $region49: #{tpu_custom_call.1} parent=1 // pred_fallthru
      _
    // Predicated region
    $region50: #{tpu_custom_call.1} parent=1 // pred_check
      _
    $region51: #{tpu_custom_call.1} parent=1 // pred_check_branch
      %94 = sbr.rel (0) target = $region53
    $region52: #{tpu_custom_call.1} parent=1 // pred_region
      %95 = dma.done [#allocation9], 2048
    $region53: #{tpu_custom_call.1} parent=1 // pred_fallthru
      _
    // Predicated region
    $region54: #{tpu_custom_call.1} parent=1 // pred_check
      _
    $region55: #{tpu_custom_call.1} parent=1 // pred_check_branch
      %97 = sbr.rel (0) target = $region57
    $region56: #{tpu_custom_call.1} parent=1 // pred_region
      %98 = dma.done [#allocation9], 1024
    $region57: #{tpu_custom_call.1} parent=1 // pred_fallthru
      _
    %v100 = vld [vmem:[#allocation2] sm:$0xf]
    %v101 = vld [vmem:[#allocation5] sm:$0xf]
    %v102 = vld [vmem:[#allocation5 + $0x4] sm:$0xf]
    %v103 = vld [vmem:[#allocation5 + $0x8] sm:$0xf]
    %v104 = vld [vmem:[#allocation5 + $0xc] sm:$0xf]
    %v105 = vld [vmem:[#allocation5 + $0x10] sm:$0xf]
    %v106 = vld [vmem:[#allocation5 + $0x14] sm:$0xf]
    %v107 = vld [vmem:[#allocation5 + $0x18] sm:$0xf]
    %v108 = vld [vmem:[#allocation5 + $0x1c] sm:$0xf]
    %v109 = vld [vmem:[#allocation5 + $0x20] sm:$0xf]
    %v110 = vld [vmem:[#allocation5 + $0x24] sm:$0xf]
    %v111 = vld [vmem:[#allocation5 + $0x28] sm:$0xf]
    %v112 = vld [vmem:[#allocation5 + $0x2c] sm:$0xf]
    %v113 = vld [vmem:[#allocation5 + $0x30] sm:$0xf]
    %v114 = vld [vmem:[#allocation5 + $0x34] sm:$0xf]
    %v115 = vld [vmem:[#allocation5 + $0x38] sm:$0xf]
    %v116 = vld [vmem:[#allocation5 + $0x3c] sm:$0xf]
    %v117 = vld [vmem:[%s2] sm:$0x1]
    %v119 = vlaneseq
    %v120 = vshrl.u32 %v119, 7
    %v121 = vsub.s32 0, %v120
    %v122 = vrot.slane %v117, %v121
    %v140 = vunpack.c.l.b16 %v101
    %v141 = vunpack.c.l.b16 %v102
    %v142 = vunpack.c.l.b16 %v103
    %v143 = vunpack.c.l.b16 %v104
    %v144 = vunpack.c.l.b16 %v105
    %v145 = vunpack.c.l.b16 %v106
    %v146 = vunpack.c.l.b16 %v107
    %v147 = vunpack.c.l.b16 %v108
    %v148 = vunpack.c.l.b16 %v109
    %v149 = vunpack.c.l.b16 %v110
    %v150 = vunpack.c.l.b16 %v111
    %v151 = vunpack.c.l.b16 %v112
    %v152 = vunpack.c.l.b16 %v113
    %v153 = vunpack.c.l.b16 %v114
    %v154 = vunpack.c.l.b16 %v115
    %v155 = vunpack.c.l.b16 %v116
    %v156 = vpack.c.b16 %v141, %v140
    %v157 = vpack.c.b16 %v143, %v142
    %v158 = vpack.c.b16 %v145, %v144
    %v159 = vpack.c.b16 %v147, %v146
    %v160 = vpack.c.b16 %v149, %v148
    %v161 = vpack.c.b16 %v151, %v150
    %v162 = vpack.c.b16 %v153, %v152
    %v163 = vpack.c.b16 %v155, %v154
    %172 = vmatprep.subr.bf16.mxu0 0
    %173 = vmatpush1.bf16.msra.mxu0 %v163
    %174 = vmatprep.subr.bf16.mxu0 0
    %175 = vmatpush1.bf16.msra.mxu0 %v162
    %176 = vmatprep.subr.bf16.mxu0 0
    %177 = vmatpush1.bf16.msra.mxu0 %v161
    %178 = vmatprep.subr.bf16.mxu0 0
    %179 = vmatpush1.bf16.msra.mxu0 %v160
    %180 = vmatprep.subr.bf16.mxu0 0
    %181 = vmatpush1.bf16.msra.mxu0 %v159
    %182 = vmatprep.subr.bf16.mxu0 0
    %183 = vmatpush1.bf16.msra.mxu0 %v158
    %184 = vmatprep.subr.bf16.mxu0 0
    %185 = vmatpush1.bf16.msra.mxu0 %v157
    %186 = vmatprep.subr.bf16.mxu0 0
    %187 = vmatpush1.bf16.msra.mxu0 %v156
    %188 = vmatprep.subr.bf16.mxu0 0
    %189 = vmatpush2.bf16.msra.mxu0 0
    %190 = vmatprep.subr.bf16.mxu0 0
    %191 = vmatpush2.bf16.msra.mxu0 0
    %192 = vmatprep.subr.bf16.mxu0 0
    %193 = vmatpush2.bf16.msra.mxu0 0
    %194 = vmatprep.subr.bf16.mxu0 0
    %195 = vmatpush2.bf16.msra.mxu0 0
    %196 = vmatprep.subr.bf16.mxu0 0
    %197 = vmatpush2.bf16.msra.mxu0 0
    %198 = vmatprep.subr.bf16.mxu0 0
    %199 = vmatpush2.bf16.msra.mxu0 0
    %200 = vmatprep.subr.bf16.mxu0 0
    %201 = vmatpush2.bf16.msra.mxu0 0
    %202 = vmatprep.subr.bf16.mxu0 0
    %203 = vmatpush2.bf16.msra.mxu0 0
    %204 = vmatprep.mubr.bf16.mxu0 0
    %205 = vmatmul.mubr.bf16.gmra.mxu0 %v100
    %v206 = vpop.f32.mrf.mxu0
    %v207 = vadd.f32 %v122, %v206
    %v208 = vpop.f32.mrf.mxu0
    %v209 = vpop.f32.mrf.mxu0
    %v210 = vpop.f32.mrf.mxu0
    %211 = vdwg.mxu0
    %v212 = vpack.c.bf16 %v207, %v207
    %v213 = vld [vmem:[#allocation7] sm:$0xf]
    %v214 = vld [vmem:[#allocation7 + $0x4] sm:$0xf]
    %v215 = vld [vmem:[#allocation7 + $0x8] sm:$0xf]
    %v216 = vld [vmem:[#allocation7 + $0xc] sm:$0xf]
    %v217 = vld [vmem:[#allocation7 + $0x10] sm:$0xf]
    %v218 = vld [vmem:[#allocation7 + $0x14] sm:$0xf]
    %v219 = vld [vmem:[#allocation7 + $0x18] sm:$0xf]
    %v220 = vld [vmem:[#allocation7 + $0x1c] sm:$0xf]
    %v221 = vld [vmem:[#allocation7 + $0x20] sm:$0xf]
    %v222 = vld [vmem:[#allocation7 + $0x24] sm:$0xf]
    %v223 = vld [vmem:[#allocation7 + $0x28] sm:$0xf]
    %v224 = vld [vmem:[#allocation7 + $0x2c] sm:$0xf]
    %v225 = vld [vmem:[#allocation7 + $0x30] sm:$0xf]
    %v226 = vld [vmem:[#allocation7 + $0x34] sm:$0xf]
    %v227 = vld [vmem:[#allocation7 + $0x38] sm:$0xf]
    %v228 = vld [vmem:[#allocation7 + $0x3c] sm:$0xf]
    %v229 = vld [vmem:[%s4] sm:$0x1]
    %v231 = vlaneseq
    %v232 = vshrl.u32 %v231, 7
    %v233 = vsub.s32 0, %v232
    %v234 = vrot.slane %v229, %v233
    %v252 = vunpack.c.l.b16 %v213
    %v253 = vunpack.c.l.b16 %v214
    %v254 = vunpack.c.l.b16 %v215
    %v255 = vunpack.c.l.b16 %v216
    %v256 = vunpack.c.l.b16 %v217
    %v257 = vunpack.c.l.b16 %v218
    %v258 = vunpack.c.l.b16 %v219
    %v259 = vunpack.c.l.b16 %v220
    %v260 = vunpack.c.l.b16 %v221
    %v261 = vunpack.c.l.b16 %v222
    %v262 = vunpack.c.l.b16 %v223
    %v263 = vunpack.c.l.b16 %v224
    %v264 = vunpack.c.l.b16 %v225
    %v265 = vunpack.c.l.b16 %v226
    %v266 = vunpack.c.l.b16 %v227
    %v267 = vunpack.c.l.b16 %v228
    %v268 = vpack.c.b16 %v253, %v252
    %v269 = vpack.c.b16 %v255, %v254
    %v270 = vpack.c.b16 %v257, %v256
    %v271 = vpack.c.b16 %v259, %v258
    %v272 = vpack.c.b16 %v261, %v260
    %v273 = vpack.c.b16 %v263, %v262
    %v274 = vpack.c.b16 %v265, %v264
    %v275 = vpack.c.b16 %v267, %v266
    %284 = vmatprep.subr.bf16.mxu0 0
    %285 = vmatpush1.bf16.msra.mxu0 %v275
    %286 = vmatprep.subr.bf16.mxu0 0
    %287 = vmatpush1.bf16.msra.mxu0 %v274
    %288 = vmatprep.subr.bf16.mxu0 0
    %289 = vmatpush1.bf16.msra.mxu0 %v273
    %290 = vmatprep.subr.bf16.mxu0 0
    %291 = vmatpush1.bf16.msra.mxu0 %v272
    %292 = vmatprep.subr.bf16.mxu0 0
    %293 = vmatpush1.bf16.msra.mxu0 %v271
    %294 = vmatprep.subr.bf16.mxu0 0
    %295 = vmatpush1.bf16.msra.mxu0 %v270
    %296 = vmatprep.subr.bf16.mxu0 0
    %297 = vmatpush1.bf16.msra.mxu0 %v269
    %298 = vmatprep.subr.bf16.mxu0 0
    %299 = vmatpush1.bf16.msra.mxu0 %v268
    %300 = vmatprep.subr.bf16.mxu0 0
    %301 = vmatpush2.bf16.msra.mxu0 0
    %302 = vmatprep.subr.bf16.mxu0 0
    %303 = vmatpush2.bf16.msra.mxu0 0
    %304 = vmatprep.subr.bf16.mxu0 0
    %305 = vmatpush2.bf16.msra.mxu0 0
    %306 = vmatprep.subr.bf16.mxu0 0
    %307 = vmatpush2.bf16.msra.mxu0 0
    %308 = vmatprep.subr.bf16.mxu0 0
    %309 = vmatpush2.bf16.msra.mxu0 0
    %310 = vmatprep.subr.bf16.mxu0 0
    %311 = vmatpush2.bf16.msra.mxu0 0
    %312 = vmatprep.subr.bf16.mxu0 0
    %313 = vmatpush2.bf16.msra.mxu0 0
    %314 = vmatprep.subr.bf16.mxu0 0
    %315 = vmatpush2.bf16.msra.mxu0 0
    %316 = vmatprep.mubr.bf16.mxu0 0
    %317 = vmatmul.mubr.bf16.gmra.mxu0 %v212
    %v318 = vpop.f32.mrf.mxu0
    %v319 = vadd.f32 %v234, %v318
    %v320 = vpop.f32.mrf.mxu0
    %v321 = vpop.f32.mrf.mxu0
    %v322 = vpop.f32.mrf.mxu0
    %323 = vdwg.mxu0
    %v324 = vmax.f32 %v319, 0.0
    %v325 = vpack.c.bf16 %v324, %v324
    %v326 = vld [vmem:[#allocation8] sm:$0xf]
    %v327 = vld [vmem:[#allocation8 + $0x4] sm:$0xf]
    %v328 = vld [vmem:[#allocation8 + $0x8] sm:$0xf]
    %v329 = vld [vmem:[#allocation8 + $0xc] sm:$0xf]
    %v330 = vld [vmem:[#allocation8 + $0x10] sm:$0xf]
    %v331 = vld [vmem:[#allocation8 + $0x14] sm:$0xf]
    %v332 = vld [vmem:[#allocation8 + $0x18] sm:$0xf]
    %v333 = vld [vmem:[#allocation8 + $0x1c] sm:$0xf]
    %v334 = vld [vmem:[#allocation8 + $0x20] sm:$0xf]
    %v335 = vld [vmem:[#allocation8 + $0x24] sm:$0xf]
    %v336 = vld [vmem:[#allocation8 + $0x28] sm:$0xf]
    %v337 = vld [vmem:[#allocation8 + $0x2c] sm:$0xf]
    %v338 = vld [vmem:[#allocation8 + $0x30] sm:$0xf]
    %v339 = vld [vmem:[#allocation8 + $0x34] sm:$0xf]
    %v340 = vld [vmem:[#allocation8 + $0x38] sm:$0xf]
    %v341 = vld [vmem:[#allocation8 + $0x3c] sm:$0xf]
    %v342 = vld [vmem:[%s6] sm:$0x1]
    %v344 = vlaneseq
    %v345 = vshrl.u32 %v344, 7
    %v346 = vsub.s32 0, %v345
    %v347 = vrot.slane %v342, %v346
    %v365 = vunpack.c.l.b16 %v326
    %v366 = vunpack.c.l.b16 %v327
    %v367 = vunpack.c.l.b16 %v328
    %v368 = vunpack.c.l.b16 %v329
    %v369 = vunpack.c.l.b16 %v330
    %v370 = vunpack.c.l.b16 %v331
    %v371 = vunpack.c.l.b16 %v332
    %v372 = vunpack.c.l.b16 %v333
    %v373 = vunpack.c.l.b16 %v334
    %v374 = vunpack.c.l.b16 %v335
    %v375 = vunpack.c.l.b16 %v336
    %v376 = vunpack.c.l.b16 %v337
    %v377 = vunpack.c.l.b16 %v338
    %v378 = vunpack.c.l.b16 %v339
    %v379 = vunpack.c.l.b16 %v340
    %v380 = vunpack.c.l.b16 %v341
    %v381 = vpack.c.b16 %v366, %v365
    %v382 = vpack.c.b16 %v368, %v367
    %v383 = vpack.c.b16 %v370, %v369
    %v384 = vpack.c.b16 %v372, %v371
    %v385 = vpack.c.b16 %v374, %v373
    %v386 = vpack.c.b16 %v376, %v375
    %v387 = vpack.c.b16 %v378, %v377
    %v388 = vpack.c.b16 %v380, %v379
    %397 = vmatprep.subr.bf16.mxu0 0
    %398 = vmatpush1.bf16.msra.mxu0 %v388
    %399 = vmatprep.subr.bf16.mxu0 0
    %400 = vmatpush1.bf16.msra.mxu0 %v387
    %401 = vmatprep.subr.bf16.mxu0 0
    %402 = vmatpush1.bf16.msra.mxu0 %v386
    %403 = vmatprep.subr.bf16.mxu0 0
    %404 = vmatpush1.bf16.msra.mxu0 %v385
    %405 = vmatprep.subr.bf16.mxu0 0
    %406 = vmatpush1.bf16.msra.mxu0 %v384
    %407 = vmatprep.subr.bf16.mxu0 0
    %408 = vmatpush1.bf16.msra.mxu0 %v383
    %409 = vmatprep.subr.bf16.mxu0 0
    %410 = vmatpush1.bf16.msra.mxu0 %v382
    %411 = vmatprep.subr.bf16.mxu0 0
    %412 = vmatpush1.bf16.msra.mxu0 %v381
    %413 = vmatprep.subr.bf16.mxu0 0
    %414 = vmatpush2.bf16.msra.mxu0 0
    %415 = vmatprep.subr.bf16.mxu0 0
    %416 = vmatpush2.bf16.msra.mxu0 0
    %417 = vmatprep.subr.bf16.mxu0 0
    %418 = vmatpush2.bf16.msra.mxu0 0
    %419 = vmatprep.subr.bf16.mxu0 0
    %420 = vmatpush2.bf16.msra.mxu0 0
    %421 = vmatprep.subr.bf16.mxu0 0
    %422 = vmatpush2.bf16.msra.mxu0 0
    %423 = vmatprep.subr.bf16.mxu0 0
    %424 = vmatpush2.bf16.msra.mxu0 0
    %425 = vmatprep.subr.bf16.mxu0 0
    %426 = vmatpush2.bf16.msra.mxu0 0
    %427 = vmatprep.subr.bf16.mxu0 0
    %428 = vmatpush2.bf16.msra.mxu0 0
    %429 = vmatprep.mubr.bf16.mxu0 0
    %430 = vmatmul.mubr.bf16.gmra.mxu0 %v325
    %v431 = vpop.f32.mrf.mxu0
    %v432 = vadd.f32 %v347, %v431
    %v433 = vpop.f32.mrf.mxu0
    %v434 = vpop.f32.mrf.mxu0
    %v435 = vpop.f32.mrf.mxu0
    %436 = vdwg.mxu0
    %v437 = vmax.f32 %v432, 0.0
    %v438 = vadd.f32 %v207, %v437
    %v439 = vpack.c.bf16 %v438, %v438
    %s440 = scalar_lea.vmem [#allocation7], 64
    %v441 = vld [vmem:[%s440] sm:$0xf]
    %v442 = vld [vmem:[%s440 + $0x4] sm:$0xf]
    %v443 = vld [vmem:[%s440 + $0x8] sm:$0xf]
    %v444 = vld [vmem:[%s440 + $0xc] sm:$0xf]
    %v445 = vld [vmem:[%s440 + $0x10] sm:$0xf]
    %v446 = vld [vmem:[%s440 + $0x14] sm:$0xf]
    %v447 = vld [vmem:[%s440 + $0x18] sm:$0xf]
    %v448 = vld [vmem:[%s440 + $0x1c] sm:$0xf]
    %v449 = vld [vmem:[%s440 + $0x20] sm:$0xf]
    %v450 = vld [vmem:[%s440 + $0x24] sm:$0xf]
    %v451 = vld [vmem:[%s440 + $0x28] sm:$0xf]
    %v452 = vld [vmem:[%s440 + $0x2c] sm:$0xf]
    %v453 = vld [vmem:[%s440 + $0x30] sm:$0xf]
    %v454 = vld [vmem:[%s440 + $0x34] sm:$0xf]
    %v455 = vld [vmem:[%s440 + $0x38] sm:$0xf]
    %v456 = vld [vmem:[%s440 + $0x3c] sm:$0xf]
    %s457 = scalar_lea.vmem %s4, 1
    %v458 = vld [vmem:[%s457] sm:$0x1]
    %v460 = vlaneseq
    %v461 = vshrl.u32 %v460, 7
    %v462 = vsub.s32 0, %v461
    %v463 = vrot.slane %v458, %v462
    %v481 = vunpack.c.l.b16 %v441
    %v482 = vunpack.c.l.b16 %v442
    %v483 = vunpack.c.l.b16 %v443
    %v484 = vunpack.c.l.b16 %v444
    %v485 = vunpack.c.l.b16 %v445
    %v486 = vunpack.c.l.b16 %v446
    %v487 = vunpack.c.l.b16 %v447
    %v488 = vunpack.c.l.b16 %v448
    %v489 = vunpack.c.l.b16 %v449
    %v490 = vunpack.c.l.b16 %v450
    %v491 = vunpack.c.l.b16 %v451
    %v492 = vunpack.c.l.b16 %v452
    %v493 = vunpack.c.l.b16 %v453
    %v494 = vunpack.c.l.b16 %v454
    %v495 = vunpack.c.l.b16 %v455
    %v496 = vunpack.c.l.b16 %v456
    %v497 = vpack.c.b16 %v482, %v481
    %v498 = vpack.c.b16 %v484, %v483
    %v499 = vpack.c.b16 %v486, %v485
    %v500 = vpack.c.b16 %v488, %v487
    %v501 = vpack.c.b16 %v490, %v489
    %v502 = vpack.c.b16 %v492, %v491
    %v503 = vpack.c.b16 %v494, %v493
    %v504 = vpack.c.b16 %v496, %v495
    %513 = vmatprep.subr.bf16.mxu0 0
    %514 = vmatpush1.bf16.msra.mxu0 %v504
    %515 = vmatprep.subr.bf16.mxu0 0
    %516 = vmatpush1.bf16.msra.mxu0 %v503
    %517 = vmatprep.subr.bf16.mxu0 0
    %518 = vmatpush1.bf16.msra.mxu0 %v502
    %519 = vmatprep.subr.bf16.mxu0 0
    %520 = vmatpush1.bf16.msra.mxu0 %v501
    %521 = vmatprep.subr.bf16.mxu0 0
    %522 = vmatpush1.bf16.msra.mxu0 %v500
    %523 = vmatprep.subr.bf16.mxu0 0
    %524 = vmatpush1.bf16.msra.mxu0 %v499
    %525 = vmatprep.subr.bf16.mxu0 0
    %526 = vmatpush1.bf16.msra.mxu0 %v498
    %527 = vmatprep.subr.bf16.mxu0 0
    %528 = vmatpush1.bf16.msra.mxu0 %v497
    %529 = vmatprep.subr.bf16.mxu0 0
    %530 = vmatpush2.bf16.msra.mxu0 0
    %531 = vmatprep.subr.bf16.mxu0 0
    %532 = vmatpush2.bf16.msra.mxu0 0
    %533 = vmatprep.subr.bf16.mxu0 0
    %534 = vmatpush2.bf16.msra.mxu0 0
    %535 = vmatprep.subr.bf16.mxu0 0
    %536 = vmatpush2.bf16.msra.mxu0 0
    %537 = vmatprep.subr.bf16.mxu0 0
    %538 = vmatpush2.bf16.msra.mxu0 0
    %539 = vmatprep.subr.bf16.mxu0 0
    %540 = vmatpush2.bf16.msra.mxu0 0
    %541 = vmatprep.subr.bf16.mxu0 0
    %542 = vmatpush2.bf16.msra.mxu0 0
    %543 = vmatprep.subr.bf16.mxu0 0
    %544 = vmatpush2.bf16.msra.mxu0 0
    %545 = vmatprep.mubr.bf16.mxu0 0
    %546 = vmatmul.mubr.bf16.gmra.mxu0 %v439
    %v547 = vpop.f32.mrf.mxu0
    %v548 = vadd.f32 %v463, %v547
    %v549 = vpop.f32.mrf.mxu0
    %v550 = vpop.f32.mrf.mxu0
    %v551 = vpop.f32.mrf.mxu0
    %552 = vdwg.mxu0
    %v553 = vmax.f32 %v548, 0.0
    %v554 = vpack.c.bf16 %v553, %v553
    %s555 = scalar_lea.vmem [#allocation8], 64
    %v556 = vld [vmem:[%s555] sm:$0xf]
    %v557 = vld [vmem:[%s555 + $0x4] sm:$0xf]
    %v558 = vld [vmem:[%s555 + $0x8] sm:$0xf]
    %v559 = vld [vmem:[%s555 + $0xc] sm:$0xf]
    %v560 = vld [vmem:[%s555 + $0x10] sm:$0xf]
    %v561 = vld [vmem:[%s555 + $0x14] sm:$0xf]
    %v562 = vld [vmem:[%s555 + $0x18] sm:$0xf]
    %v563 = vld [vmem:[%s555 + $0x1c] sm:$0xf]
    %v564 = vld [vmem:[%s555 + $0x20] sm:$0xf]
    %v565 = vld [vmem:[%s555 + $0x24] sm:$0xf]
    %v566 = vld [vmem:[%s555 + $0x28] sm:$0xf]
    %v567 = vld [vmem:[%s555 + $0x2c] sm:$0xf]
    %v568 = vld [vmem:[%s555 + $0x30] sm:$0xf]
    %v569 = vld [vmem:[%s555 + $0x34] sm:$0xf]
    %v570 = vld [vmem:[%s555 + $0x38] sm:$0xf]
    %v571 = vld [vmem:[%s555 + $0x3c] sm:$0xf]
    %s572 = scalar_lea.vmem %s6, 1
    %v573 = vld [vmem:[%s572] sm:$0x1]
    %v575 = vlaneseq
    %v576 = vshrl.u32 %v575, 7
    %v577 = vsub.s32 0, %v576
    %v578 = vrot.slane %v573, %v577
    %v596 = vunpack.c.l.b16 %v556
    %v597 = vunpack.c.l.b16 %v557
    %v598 = vunpack.c.l.b16 %v558
    %v599 = vunpack.c.l.b16 %v559
    %v600 = vunpack.c.l.b16 %v560
    %v601 = vunpack.c.l.b16 %v561
    %v602 = vunpack.c.l.b16 %v562
    %v603 = vunpack.c.l.b16 %v563
    %v604 = vunpack.c.l.b16 %v564
    %v605 = vunpack.c.l.b16 %v565
    %v606 = vunpack.c.l.b16 %v566
    %v607 = vunpack.c.l.b16 %v567
    %v608 = vunpack.c.l.b16 %v568
    %v609 = vunpack.c.l.b16 %v569
    %v610 = vunpack.c.l.b16 %v570
    %v611 = vunpack.c.l.b16 %v571
    %v612 = vpack.c.b16 %v597, %v596
    %v613 = vpack.c.b16 %v599, %v598
    %v614 = vpack.c.b16 %v601, %v600
    %v615 = vpack.c.b16 %v603, %v602
    %v616 = vpack.c.b16 %v605, %v604
    %v617 = vpack.c.b16 %v607, %v606
    %v618 = vpack.c.b16 %v609, %v608
    %v619 = vpack.c.b16 %v611, %v610
    %628 = vmatprep.subr.bf16.mxu0 0
    %629 = vmatpush1.bf16.msra.mxu0 %v619
    %630 = vmatprep.subr.bf16.mxu0 0
    %631 = vmatpush1.bf16.msra.mxu0 %v618
    %632 = vmatprep.subr.bf16.mxu0 0
    %633 = vmatpush1.bf16.msra.mxu0 %v617
    %634 = vmatprep.subr.bf16.mxu0 0
    %635 = vmatpush1.bf16.msra.mxu0 %v616
    %636 = vmatprep.subr.bf16.mxu0 0
    %637 = vmatpush1.bf16.msra.mxu0 %v615
    %638 = vmatprep.subr.bf16.mxu0 0
    %639 = vmatpush1.bf16.msra.mxu0 %v614
    %640 = vmatprep.subr.bf16.mxu0 0
    %641 = vmatpush1.bf16.msra.mxu0 %v613
    %642 = vmatprep.subr.bf16.mxu0 0
    %643 = vmatpush1.bf16.msra.mxu0 %v612
    %644 = vmatprep.subr.bf16.mxu0 0
    %645 = vmatpush2.bf16.msra.mxu0 0
    %646 = vmatprep.subr.bf16.mxu0 0
    %647 = vmatpush2.bf16.msra.mxu0 0
    %648 = vmatprep.subr.bf16.mxu0 0
    %649 = vmatpush2.bf16.msra.mxu0 0
    %650 = vmatprep.subr.bf16.mxu0 0
    %651 = vmatpush2.bf16.msra.mxu0 0
    %652 = vmatprep.subr.bf16.mxu0 0
    %653 = vmatpush2.bf16.msra.mxu0 0
    %654 = vmatprep.subr.bf16.mxu0 0
    %655 = vmatpush2.bf16.msra.mxu0 0
    %656 = vmatprep.subr.bf16.mxu0 0
    %657 = vmatpush2.bf16.msra.mxu0 0
    %658 = vmatprep.subr.bf16.mxu0 0
    %659 = vmatpush2.bf16.msra.mxu0 0
    %660 = vmatprep.mubr.bf16.mxu0 0
    %661 = vmatmul.mubr.bf16.gmra.mxu0 %v554
    %v662 = vpop.f32.mrf.mxu0
    %v663 = vadd.f32 %v578, %v662
    %v664 = vpop.f32.mrf.mxu0
    %v665 = vpop.f32.mrf.mxu0
    %v666 = vpop.f32.mrf.mxu0
    %667 = vdwg.mxu0
    %v668 = vmax.f32 %v663, 0.0
    %v669 = vadd.f32 %v438, %v668
    %v670 = vpack.c.bf16 %v669, %v669
    %v671 = vld [vmem:[#allocation10] sm:$0xf]
    %v672 = vld [vmem:[#allocation10 + $0x4] sm:$0xf]
    %v673 = vld [vmem:[#allocation10 + $0x8] sm:$0xf]
    %v674 = vld [vmem:[#allocation10 + $0xc] sm:$0xf]
    %v675 = vld [vmem:[#allocation10 + $0x10] sm:$0xf]
    %v676 = vld [vmem:[#allocation10 + $0x14] sm:$0xf]
    %v677 = vld [vmem:[#allocation10 + $0x18] sm:$0xf]
    %v678 = vld [vmem:[#allocation10 + $0x1c] sm:$0xf]
    %v679 = vld [vmem:[#allocation10 + $0x20] sm:$0xf]
    %v680 = vld [vmem:[#allocation10 + $0x24] sm:$0xf]
    %v681 = vld [vmem:[#allocation10 + $0x28] sm:$0xf]
    %v682 = vld [vmem:[#allocation10 + $0x2c] sm:$0xf]
    %v683 = vld [vmem:[#allocation10 + $0x30] sm:$0xf]
    %v684 = vld [vmem:[#allocation10 + $0x34] sm:$0xf]
    %v685 = vld [vmem:[#allocation10 + $0x38] sm:$0xf]
    %v686 = vld [vmem:[#allocation10 + $0x3c] sm:$0xf]
    %v687 = vld [vmem:[%s8] sm:$0x1]
    %v689 = vlaneseq
    %v690 = vshrl.u32 %v689, 7
    %v691 = vsub.s32 0, %v690
    %v692 = vrot.slane %v687, %v691
    %v710 = vunpack.c.l.b16 %v671
    %v711 = vunpack.c.l.b16 %v672
    %v712 = vunpack.c.l.b16 %v673
    %v713 = vunpack.c.l.b16 %v674
    %v714 = vunpack.c.l.b16 %v675
    %v715 = vunpack.c.l.b16 %v676
    %v716 = vunpack.c.l.b16 %v677
    %v717 = vunpack.c.l.b16 %v678
    %v718 = vunpack.c.l.b16 %v679
    %v719 = vunpack.c.l.b16 %v680
    %v720 = vunpack.c.l.b16 %v681
    %v721 = vunpack.c.l.b16 %v682
    %v722 = vunpack.c.l.b16 %v683
    %v723 = vunpack.c.l.b16 %v684
    %v724 = vunpack.c.l.b16 %v685
    %v725 = vunpack.c.l.b16 %v686
    %v726 = vpack.c.b16 %v711, %v710
    %v727 = vpack.c.b16 %v713, %v712
    %v728 = vpack.c.b16 %v715, %v714
    %v729 = vpack.c.b16 %v717, %v716
    %v730 = vpack.c.b16 %v719, %v718
    %v731 = vpack.c.b16 %v721, %v720
    %v732 = vpack.c.b16 %v723, %v722
    %v733 = vpack.c.b16 %v725, %v724
    %742 = vmatprep.subr.bf16.mxu0 0
    %743 = vmatpush1.bf16.msra.mxu0 %v733
    %744 = vmatprep.subr.bf16.mxu0 0
    %745 = vmatpush1.bf16.msra.mxu0 %v732
    %746 = vmatprep.subr.bf16.mxu0 0
    %747 = vmatpush1.bf16.msra.mxu0 %v731
    %748 = vmatprep.subr.bf16.mxu0 0
    %749 = vmatpush1.bf16.msra.mxu0 %v730
    %750 = vmatprep.subr.bf16.mxu0 0
    %751 = vmatpush1.bf16.msra.mxu0 %v729
    %752 = vmatprep.subr.bf16.mxu0 0
    %753 = vmatpush1.bf16.msra.mxu0 %v728
    %754 = vmatprep.subr.bf16.mxu0 0
    %755 = vmatpush1.bf16.msra.mxu0 %v727
    %756 = vmatprep.subr.bf16.mxu0 0
    %757 = vmatpush1.bf16.msra.mxu0 %v726
    %758 = vmatprep.subr.bf16.mxu0 0
    %759 = vmatpush2.bf16.msra.mxu0 0
    %760 = vmatprep.subr.bf16.mxu0 0
    %761 = vmatpush2.bf16.msra.mxu0 0
    %762 = vmatprep.subr.bf16.mxu0 0
    %763 = vmatpush2.bf16.msra.mxu0 0
    %764 = vmatprep.subr.bf16.mxu0 0
    %765 = vmatpush2.bf16.msra.mxu0 0
    %766 = vmatprep.subr.bf16.mxu0 0
    %767 = vmatpush2.bf16.msra.mxu0 0
    %768 = vmatprep.subr.bf16.mxu0 0
    %769 = vmatpush2.bf16.msra.mxu0 0
    %770 = vmatprep.subr.bf16.mxu0 0
    %771 = vmatpush2.bf16.msra.mxu0 0
    %772 = vmatprep.subr.bf16.mxu0 0
    %773 = vmatpush2.bf16.msra.mxu0 0
    %774 = vmatprep.mubr.bf16.mxu0 0
    %775 = vmatmul.mubr.bf16.gmra.mxu0 %v670
    %v776 = vpop.f32.mrf.mxu0
    %v777 = vadd.f32 %v692, %v776
    %v778 = vpop.f32.mrf.mxu0
    %v779 = vpop.f32.mrf.mxu0
    %v780 = vpop.f32.mrf.mxu0
    %781 = vdwg.mxu0
    %782 = vst [vmem:[#allocation11] sm:$0xff] %v777
    // Predicated region
    $region58: #{tpu_custom_call.1} parent=1 // pred_check
      _
    $region59: #{tpu_custom_call.1} parent=1 // pred_check_branch
      %784 = sbr.rel (0) target = $region61
    $region60: #{tpu_custom_call.1} parent=1 // pred_region
      %s786 = ssub.s32 128, 128
      %787 = vsyncadd [#allocation4], %s786
      %s789 = sshll.u32 [#allocation11], 4
      %s790 = int_to_ptr.vmem [resolvable:$true] %s789
      %792 = dma.vmem_to_hbm [thread:$0]  %s790, 128, %s9, [#allocation4]
    $region61: #{tpu_custom_call.1} parent=1 // pred_fallthru
      _
    // Predicated region
    $region62: #{tpu_custom_call.1} parent=1 // pred_check
      _
    $region63: #{tpu_custom_call.1} parent=1 // pred_check_branch
      %794 = sbr.rel (0) target = $region65
    $region64: #{tpu_custom_call.1} parent=1 // pred_region
      %795 = dma.done [#allocation4], 128
    $region65: #{tpu_custom_call.1} parent=1 // pred_fallthru
      _
    %796 = vsyncpa [#allocation3], 1
    %797 = vsyncpa [#allocation6], 1
    %798 = vsyncpa [#allocation9], 1
    %799 = vsyncpa [#allocation4], 1

</llo_original>
